<compile_context>
chip_gen: v6e
topology: v6e:2x2x1
jax: 0.10.0
libtpu: 0.0.40
codegen_flags: <defaults>
</compile_context>

<pallas_src>
import functools

import jax
import jax.numpy as jnp
import numpy as np
from jax.experimental import pallas as pl
from jax.experimental.pallas import tpu as pltpu

EPS = 1e-5


def _fused_kernel(scale_ref, x255_ref, gamma_ref, beta_ref, w2_ref, w1_ref,
                  x249_ref, out_ref, x261_ref, x265_ref, *, m_real, tk):
    # Resident (constant block index, DMA'd once):
    #   scale_ref : (C, 1)  f32   per-channel multiplier (x260)
    #   x255_ref  : (C, M)  f32
    #   gamma_ref : (C, 1)  f32
    #   beta_ref  : (C, 1)  f32
    #   w2_ref    : (C, C)  bf16  torch (Cout, Cin) layout
    # Streamed per channel tile k:
    #   w1_ref    : (tk, C) bf16  row tile of torch (Cout, Cin) W1
    #   x249_ref  : (tk, M) f32   residual row tile
    # Output (resident, written once at the last step):
    #   out_ref   : (C, M)  f32
    # Scratch:
    #   x261_ref  : (C, M)  bf16  x260 * x255, built once at k == 0
    #   x265_ref  : (C, M)  bf16  relu(x249 + BN(conv1)), gathered over k tiles
    k = pl.program_id(0)
    nk = pl.num_programs(0)

    @pl.when(k == 0)
    def _build_x261():
        # x261 = x260 * x255 (f32 VPU), cached once in bf16 for the MXU.
        x261_ref[...] = (x255_ref[...] * scale_ref[...]).astype(jnp.bfloat16)

    # conv2d83 row tile: (tk, C) @ (C, M) -> (tk, M)   [bf16 MXU, f32 acc].
    x262 = jnp.dot(w1_ref[...], x261_ref[...],
                   preferred_element_type=jnp.float32)

    # BatchNorm2d, training mode: per-channel batch stats over N*H*W (N == 1),
    # biased variance.  Two-pass: the centered value is needed for the output
    # anyway, so this costs nothing and avoids E[x^2] - mean^2 cancellation.
    inv_m = 1.0 / m_real
    mean = jnp.sum(x262, axis=1, keepdims=True) * inv_m
    xc = x262 - mean
    var = jnp.sum(xc * xc, axis=1, keepdims=True) * inv_m

    row0 = pl.multiple_of(k * tk, 8)
    g = gamma_ref[pl.ds(row0, tk), :]
    b = beta_ref[pl.ds(row0, tk), :]
    x263 = xc * (jax.lax.rsqrt(var + EPS) * g) + b

    # residual add + ReLU in f32, cached in bf16 for the second matmul.
    x265_ref[pl.ds(row0, tk), :] = jnp.maximum(
        x249_ref[...] + x263, 0.0).astype(jnp.bfloat16)

    # conv2d84 once, after the last channel tile of x265 is in place:
    # plain (C, C) @ (C, M) matmul -> no transposed contraction, no per-step
    # accumulator read-modify-write, no zero-init store.
    @pl.when(k == nk - 1)
    def _conv2():
        out_ref[...] = jnp.dot(w2_ref[...], x265_ref[...],
                               preferred_element_type=jnp.float32)


def _pick_tile(c):
    """Largest multiple-of-8 divisor of c that is <= c // 2 (c itself if none).

    Aims for a 2-step channel grid (e.g. 1232 -> 616): tiles big enough to
    amortize the ~0.35us fixed per-step cost while still overlapping the
    second W1 / x249 tile DMA with the first tile's compute.
    """
    best = c
    for t in range(8, c // 2 + 1, 8):
        if c % t == 0:
            best = t
    return best


def prepare_params(w1, gamma, beta, w2):
    """One-time (cacheable) parameter prep; keep OUT of the per-call path.

    Only bf16 casts + reshapes.  W1 and W2 both stay in the natural torch
    (Cout, Cin) layout, so no transpose kernels are needed anywhere.
    """
    C = w1.shape[0]
    w1_b = w1.reshape(C, C).astype(jnp.bfloat16)
    w2_b = w2.reshape(C, C).astype(jnp.bfloat16)
    gamma_r = gamma.reshape(C, 1).astype(jnp.float32)
    beta_r = beta.reshape(C, 1).astype(jnp.float32)
    return w1_b, w2_b, gamma_r, beta_r


def fused_forward(x260, x255, x249, w1_b, w2_b, gamma_r, beta_r):
    """x260:(1,C,1,1)  x255/x249:(1,C,H,W)  w1_b/w2_b:(C,C) bf16  gamma/beta:(C,1)."""
    N, C, H, W = x255.shape
    assert N == 1, "kernel assumes N == 1 (per-sample scale and BN batch stats)"
    # TODO(synk): N > 1 would need per-sample scale rows and stats over N*H*W.
    M = H * W
    tk = _pick_tile(C)
    nk = C // tk

    # N==1 NCHW -> (C, M) is a pure reshape (no transpose, no pad, no copy).
    x255_r = x255.reshape(C, M)
    x249_r = x249.reshape(C, M)
    scale = x260.reshape(C, 1)

    kernel = functools.partial(_fused_kernel, m_real=float(M), tk=tk)

    out_r = pl.pallas_call(
        kernel,
        out_shape=jax.ShapeDtypeStruct((C, M), jnp.float32),
        grid_spec=pltpu.PrefetchScalarGridSpec(
            num_scalar_prefetch=0,
            grid=(nk,),
            in_specs=[
                pl.BlockSpec((C, 1), lambda k: (0, 0)),    # scale   (resident)
                pl.BlockSpec((C, M), lambda k: (0, 0)),    # x255    (resident)
                pl.BlockSpec((C, 1), lambda k: (0, 0)),    # gamma   (resident)
                pl.BlockSpec((C, 1), lambda k: (0, 0)),    # beta    (resident)
                pl.BlockSpec((C, C), lambda k: (0, 0)),    # W2      (resident)
                pl.BlockSpec((tk, C), lambda k: (k, 0)),   # W1 row tile
                pl.BlockSpec((tk, M), lambda k: (k, 0)),   # x249 row tile
            ],
            out_specs=pl.BlockSpec((C, M), lambda k: (0, 0)),   # written at end
            scratch_shapes=[pltpu.VMEM((C, M), jnp.bfloat16),   # x261
                            pltpu.VMEM((C, M), jnp.bfloat16)],  # x265
        ),
        compiler_params=pltpu.CompilerParams(
            dimension_semantics=("arbitrary",),
            vmem_limit_bytes=40 * 1024 * 1024),
    )(scale, x255_r, gamma_r, beta_r, w2_b, w1_b, x249_r)

    # (C, M) -> NCHW is again a pure reshape.
    return out_r.reshape(N, C, H, W)


def reference_forward(x260, x255, x249, w1, gamma, beta, w2):
    """Plain-JAX reference mirroring the PyTorch module (training-mode BN)."""
    N, C, H, W = x255.shape
    x261 = x260 * x255
    x262 = jax.lax.conv_general_dilated(
        x261, w1, window_strides=(1, 1), padding="VALID",
        dimension_numbers=("NCHW", "OIHW", "NCHW"))
    mean = jnp.mean(x262, axis=(0, 2, 3), keepdims=True)
    var = jnp.mean((x262 - mean) ** 2, axis=(0, 2, 3), keepdims=True)
    x263 = (x262 - mean) * jax.lax.rsqrt(var + EPS) \
        * gamma.reshape(1, C, 1, 1) + beta.reshape(1, C, 1, 1)
    x265 = jnp.maximum(x249 + x263, 0.0)
    x266 = jax.lax.conv_general_dilated(
        x265, w2, window_strides=(1, 1), padding="VALID",
        dimension_numbers=("NCHW", "OIHW", "NCHW"))
    return x266


if __name__ == "__main__":
    # Small shapes consistent with the module (original: N=1, C=1232, H=W=14).
    N, C, H, W = 1, 256, 14, 14

    key = jax.random.PRNGKey(0)
    k1, k2, k3, k4, k5, k6, k7 = jax.random.split(key, 7)

    x260 = jax.random.normal(k1, (N, C, 1, 1), dtype=jnp.float32)
    x255 = jax.random.normal(k2, (N, C, H, W), dtype=jnp.float32)
    x249 = jax.random.normal(k3, (N, C, H, W), dtype=jnp.float32)

    w1 = jax.random.normal(k4, (C, C, 1, 1), dtype=jnp.float32) * (1.0 / np.sqrt(C))
    w2 = jax.random.normal(k5, (C, C, 1, 1), dtype=jnp.float32) * (1.0 / np.sqrt(C))
    gamma = 1.0 + 0.1 * jax.random.normal(k6, (C,), dtype=jnp.float32)
    beta = 0.1 * jax.random.normal(k7, (C,), dtype=jnp.float32)

    # One-time parameter prep (cacheable in real use; not in the per-call path).
    w1_b, w2_b, gamma_r, beta_r = jax.block_until_ready(
        prepare_params(w1, gamma, beta, w2))

    out = jax.block_until_ready(
        fused_forward(x260, x255, x249, w1_b, w2_b, gamma_r, beta_r))
    ref = jax.block_until_ready(
        reference_forward(x260, x255, x249, w1, gamma, beta, w2))

    assert out.shape == (N, C, H, W)
    # Kernel uses bf16 MXU operands (f32 accumulation) vs the all-f32 reference.
    np.testing.assert_allclose(np.asarray(out), np.asarray(ref),
                               rtol=5e-2, atol=5e-2)
    print("KERNEL_OK")
</pallas_src>

<mosaic_0001>
module attributes {stable_mosaic.version = 11 : i64} {
  func.func @_fused_kernel(%arg0: i32, %arg1: memref<256x1xf32, #tpu.memory_space<vmem>>, %arg2: memref<256x196xf32, #tpu.memory_space<vmem>>, %arg3: memref<256x1xf32, #tpu.memory_space<vmem>>, %arg4: memref<256x1xf32, #tpu.memory_space<vmem>>, %arg5: memref<256x256xbf16, #tpu.memory_space<vmem>>, %arg6: memref<128x256xbf16, #tpu.memory_space<vmem>>, %arg7: memref<128x196xf32, #tpu.memory_space<vmem>>, %arg8: memref<256x196xf32, #tpu.memory_space<vmem>>, %arg9: memref<256x196xbf16, #tpu.memory_space<vmem>>, %arg10: memref<256x196xbf16, #tpu.memory_space<vmem>>) attributes {dimension_semantics = [#tpu.dimension_semantics<arbitrary>], iteration_bounds = array<i64: 2>, scalar_prefetch = 0 : i64, scratch_operands = 2 : i64, tpu.core_type = #tpu.core_type<tc>, window_params = [{pipeline_mode = #tpu.pipeline_mode<synchronous>, transform_indices = @transform_0, window_bounds = array<i64: 256, 1>}, {pipeline_mode = #tpu.pipeline_mode<synchronous>, transform_indices = @transform_1, window_bounds = array<i64: 256, 196>}, {pipeline_mode = #tpu.pipeline_mode<synchronous>, transform_indices = @transform_2, window_bounds = array<i64: 256, 1>}, {pipeline_mode = #tpu.pipeline_mode<synchronous>, transform_indices = @transform_3, window_bounds = array<i64: 256, 1>}, {pipeline_mode = #tpu.pipeline_mode<synchronous>, transform_indices = @transform_4, window_bounds = array<i64: 256, 256>}, {transform_indices = @transform_5, window_bounds = array<i64: 128, 256>}, {transform_indices = @transform_6, window_bounds = array<i64: 128, 196>}, {pipeline_mode = #tpu.pipeline_mode<synchronous>, transform_indices = @transform_7, window_bounds = array<i64: 256, 196>}]} {
    %c0_i32 = arith.constant 0 : i32
    %0 = arith.cmpi eq, %arg0, %c0_i32 : i32
    %1 = arith.extui %0 : i1 to i32
    %c0_i32_0 = arith.constant 0 : i32
    %2 = arith.cmpi ne, %1, %c0_i32_0 : i32
    scf.if %2 {
      %c0_16 = arith.constant 0 : index
      %c0_17 = arith.constant 0 : index
      %41 = vector.load %arg2[%c0_16, %c0_17] : memref<256x196xf32, #tpu.memory_space<vmem>>, vector<256x196xf32>
      %c0_18 = arith.constant 0 : index
      %c0_19 = arith.constant 0 : index
      %42 = vector.load %arg1[%c0_18, %c0_19] : memref<256x1xf32, #tpu.memory_space<vmem>>, vector<256x1xf32>
      %43 = vector.broadcast %42 : vector<256x1xf32> to vector<256x196xf32>
      %44 = arith.mulf %41, %43 : vector<256x196xf32>
      %45 = arith.truncf %44 : vector<256x196xf32> to vector<256x196xbf16>
      %c0_20 = arith.constant 0 : index
      %c0_21 = arith.constant 0 : index
      %46 = vector.load %arg9[%c0_20, %c0_21] : memref<256x196xbf16, #tpu.memory_space<vmem>>, vector<256x196xbf16>
      tpu.vector_store %arg9[%c0_20, %c0_21], %45 {strides = array<i32>} : memref<256x196xbf16, #tpu.memory_space<vmem>>, vector<256x196xbf16>,
    } else {
    }
    %c0 = arith.constant 0 : index
    %c0_1 = arith.constant 0 : index
    %3 = vector.load %arg6[%c0, %c0_1] : memref<128x256xbf16, #tpu.memory_space<vmem>>, vector<128x256xbf16>
    %c0_2 = arith.constant 0 : index
    %c0_3 = arith.constant 0 : index
    %4 = vector.load %arg9[%c0_2, %c0_3] : memref<256x196xbf16, #tpu.memory_space<vmem>>, vector<256x196xbf16>
    %cst = arith.constant dense<0.000000e+00> : vector<128x196xf32>
    %5 = tpu.matmul %3, %4, %cst {dimension_numbers = #tpu.dot_dimension_numbers<[1], [0], [0], [1], [0, 0, 1, 1], [], []>} : vector<128x256xbf16>, vector<256x196xbf16>, vector<128x196xf32> -> vector<128x196xf32>
    %cst_4 = arith.constant dense<0.000000e+00> : vector<128xf32>
    %6 = vector.multi_reduction <add>, %5, %cst_4 [1] : vector<128x196xf32> to vector<128xf32>
    %7 = vector.shape_cast %6 : vector<128xf32> to vector<128x1xf32>
    %cst_5 = arith.constant 0.00510204071 : f32
    %8 = vector.broadcast %cst_5 : f32 to vector<128x1xf32>
    %9 = arith.mulf %7, %8 : vector<128x1xf32>
    %10 = vector.broadcast %9 : vector<128x1xf32> to vector<128x196xf32>
    %11 = arith.subf %5, %10 : vector<128x196xf32>
    %12 = arith.mulf %11, %11 : vector<128x196xf32>
    %cst_6 = arith.constant dense<0.000000e+00> : vector<128xf32>
    %13 = vector.multi_reduction <add>, %12, %cst_6 [1] : vector<128x196xf32> to vector<128xf32>
    %14 = vector.shape_cast %13 : vector<128xf32> to vector<128x1xf32>
    %cst_7 = arith.constant 0.00510204071 : f32
    %15 = vector.broadcast %cst_7 : f32 to vector<128x1xf32>
    %16 = arith.mulf %14, %15 : vector<128x1xf32>
    %c128_i32 = arith.constant 128 : i32
    %17 = arith.muli %arg0, %c128_i32 : i32
    %18 = tpu.assume_multiple %17, 8 : i32
    %19 = arith.index_cast %18 : i32 to index
    %c0_8 = arith.constant 0 : index
    %20 = vector.load %arg3[%19, %c0_8] : memref<256x1xf32, #tpu.memory_space<vmem>>, vector<128x1xf32>
    %21 = arith.index_cast %18 : i32 to index
    %c0_9 = arith.constant 0 : index
    %22 = vector.load %arg4[%21, %c0_9] : memref<256x1xf32, #tpu.memory_space<vmem>>, vector<128x1xf32>
    %cst_10 = arith.constant 9.99999974E-6 : f32
    %23 = vector.broadcast %cst_10 : f32 to vector<128x1xf32>
    %24 = arith.addf %16, %23 : vector<128x1xf32>
    %25 = math.rsqrt %24 : vector<128x1xf32>
    %26 = arith.mulf %25, %20 : vector<128x1xf32>
    %27 = vector.broadcast %26 : vector<128x1xf32> to vector<128x196xf32>
    %28 = arith.mulf %11, %27 : vector<128x196xf32>
    %29 = vector.broadcast %22 : vector<128x1xf32> to vector<128x196xf32>
    %30 = arith.addf %28, %29 : vector<128x196xf32>
    %c0_11 = arith.constant 0 : index
    %c0_12 = arith.constant 0 : index
    %31 = vector.load %arg7[%c0_11, %c0_12] : memref<128x196xf32, #tpu.memory_space<vmem>>, vector<128x196xf32>
    %32 = arith.addf %31, %30 : vector<128x196xf32>
    %cst_13 = arith.constant 0.000000e+00 : f32
    %33 = vector.broadcast %cst_13 : f32 to vector<128x196xf32>
    %34 = arith.maximumf %32, %33 : vector<128x196xf32>
    %35 = arith.truncf %34 : vector<128x196xf32> to vector<128x196xbf16>
    %36 = arith.index_cast %18 : i32 to index
    %c0_14 = arith.constant 0 : index
    %37 = vector.load %arg10[%36, %c0_14] : memref<256x196xbf16, #tpu.memory_space<vmem>>, vector<128x196xbf16>
    tpu.vector_store %arg10[%36, %c0_14], %35 {strides = array<i32>} : memref<256x196xbf16, #tpu.memory_space<vmem>>, vector<128x196xbf16>,
    %c1_i32 = arith.constant 1 : i32
    %38 = arith.cmpi eq, %arg0, %c1_i32 : i32
    %39 = arith.extui %38 : i1 to i32
    %c0_i32_15 = arith.constant 0 : i32
    %40 = arith.cmpi ne, %39, %c0_i32_15 : i32
    scf.if %40 {
      %c0_16 = arith.constant 0 : index
      %c0_17 = arith.constant 0 : index
      %41 = vector.load %arg5[%c0_16, %c0_17] : memref<256x256xbf16, #tpu.memory_space<vmem>>, vector<256x256xbf16>
      %c0_18 = arith.constant 0 : index
      %c0_19 = arith.constant 0 : index
      %42 = vector.load %arg10[%c0_18, %c0_19] : memref<256x196xbf16, #tpu.memory_space<vmem>>, vector<256x196xbf16>
      %cst_20 = arith.constant dense<0.000000e+00> : vector<256x196xf32>
      %43 = tpu.matmul %41, %42, %cst_20 {dimension_numbers = #tpu.dot_dimension_numbers<[1], [0], [0], [1], [0, 0, 1, 1], [], []>} : vector<256x256xbf16>, vector<256x196xbf16>, vector<256x196xf32> -> vector<256x196xf32>
      %c0_21 = arith.constant 0 : index
      %c0_22 = arith.constant 0 : index
      %44 = vector.load %arg8[%c0_21, %c0_22] : memref<256x196xf32, #tpu.memory_space<vmem>>, vector<256x196xf32>
      tpu.vector_store %arg8[%c0_21, %c0_22], %43 {strides = array<i32>} : memref<256x196xf32, #tpu.memory_space<vmem>>, vector<256x196xf32>,
    } else {
    }
    return
  }
  func.func @transform_0(%arg0: i32) -> (i32, i32) {
    %c0_i32 = arith.constant 0 : i32
    %c0_i32_0 = arith.constant 0 : i32
    %c0_i32_1 = arith.constant 0 : i32
    return %c0_i32, %c0_i32_0 : i32, i32
  }
  func.func @transform_1(%arg0: i32) -> (i32, i32) {
    %c0_i32 = arith.constant 0 : i32
    %c0_i32_0 = arith.constant 0 : i32
    %c0_i32_1 = arith.constant 0 : i32
    return %c0_i32, %c0_i32_0 : i32, i32
  }
  func.func @transform_2(%arg0: i32) -> (i32, i32) {
    %c0_i32 = arith.constant 0 : i32
    %c0_i32_0 = arith.constant 0 : i32
    %c0_i32_1 = arith.constant 0 : i32
    return %c0_i32, %c0_i32_0 : i32, i32
  }
  func.func @transform_3(%arg0: i32) -> (i32, i32) {
    %c0_i32 = arith.constant 0 : i32
    %c0_i32_0 = arith.constant 0 : i32
    %c0_i32_1 = arith.constant 0 : i32
    return %c0_i32, %c0_i32_0 : i32, i32
  }
  func.func @transform_4(%arg0: i32) -> (i32, i32) {
    %c0_i32 = arith.constant 0 : i32
    %c0_i32_0 = arith.constant 0 : i32
    %c0_i32_1 = arith.constant 0 : i32
    return %c0_i32, %c0_i32_0 : i32, i32
  }
  func.func @transform_5(%arg0: i32) -> (i32, i32) {
    %c0_i32 = arith.constant 0 : i32
    %c0_i32_0 = arith.constant 0 : i32
    return %arg0, %c0_i32 : i32, i32
  }
  func.func @transform_6(%arg0: i32) -> (i32, i32) {
    %c0_i32 = arith.constant 0 : i32
    %c0_i32_0 = arith.constant 0 : i32
    return %arg0, %c0_i32 : i32, i32
  }
  func.func @transform_7(%arg0: i32) -> (i32, i32) {
    %c0_i32 = arith.constant 0 : i32
    %c0_i32_0 = arith.constant 0 : i32
    %c0_i32_1 = arith.constant 0 : i32
    return %c0_i32, %c0_i32_0 : i32, i32
  }
}

</mosaic_0001>

<llo_original>
// kernel: tpu_custom_call.1
$region0: #{tpu_custom_call.1}
  #allocation0 [shape = 'u32[]', space=smem, size = 0x4, offset = 0x4, fixed_abs, tag = 'smem constant byte address 0x4 - core index']
  #allocation1 [shape = 'u32[144,128]{1,0:T(1,128)}', space=vmem, size = 0x12000, scoped, tag = 'internal scratch']
  #allocation2 [shape = 'bf16[256,196]{1,0:T(8,128)(2,1)}', space=vmem, size = 0x20000, scoped, tag = 'scratch operand']
  #allocation3 [shape = 'bf16[256,196]{1,0:T(8,128)(2,1)}', space=vmem, size = 0x20000, scoped, tag = 'scratch operand']
  %s0 = inlined_call_operand.vmem [shape: f32[256,1], index: 0, kind: input, shape index: {}]
  %s1 = inlined_call_operand.vmem [shape: f32[256,196], index: 1, kind: input, shape index: {}]
  %s2 = inlined_call_operand.vmem [shape: f32[256,1], index: 2, kind: input, shape index: {}]
  %s3 = inlined_call_operand.vmem [shape: f32[256,1], index: 3, kind: input, shape index: {}]
  %s4 = inlined_call_operand.vmem [shape: bf16[256,256], index: 4, kind: input, shape index: {}]
  %s5 = inlined_call_operand.vmem [shape: bf16[256,256], index: 5, kind: input, shape index: {}]
  %s6 = inlined_call_operand.vmem [shape: f32[256,196], index: 6, kind: input, shape index: {}]
  %s7 = inlined_call_operand.vmem [shape: f32[256,196], index: 7, kind: output, shape index: {}]
  %s8 = sld [smem:[#allocation0]]
  $region69: #{tpu_custom_call.1} parent=0
    _
  %s10 = ssub.s32 1, %s8
  %s11 = scalar_select 0, %s10, %s8
  loop: start=0, step=1, limit=4
  $region2: #{tpu_custom_call.1} parent=0 // loop_pre_header
    _
  $region3: #{tpu_custom_call.1} parent=0 // loop_header
    %s13 = sphi 0, %s17
    %p14 = scmp.ge.s32.totalorder %s13, 4
    %s21 = sphi 0, %s21
    %s23 = sphi 0, %s21
    %s24 = sphi 0, %s23
    %s38 = sphi 0, %s24
    %s42 = sphi 0, %s42
    %s44 = sphi 0, %s42
    %s45 = sphi 0, %s44
    %s59 = sphi 0, %s45
    %s63 = sphi 0, %s63
    %s65 = sphi 0, %s63
    %s66 = sphi 0, %s65
    %s80 = sphi 0, %s66
    %s84 = sphi 0, %s84
    %s86 = sphi 0, %s84
    %s87 = sphi 0, %s86
    %s101 = sphi 0, %s87
    %s105 = sphi 0, %s105
    %s107 = sphi 0, %s105
    %s108 = sphi 0, %s107
    %s122 = sphi 0, %s108
    %s128 = sphi 0, %s130
    %s131 = sphi 0, %s128
    %s132 = sphi 0, %s131
    %s148 = sphi 0, %s132
    %s154 = sphi 0, %s156
    %s157 = sphi 0, %s154
    %s158 = sphi 0, %s157
    %s174 = sphi 0, %s158
    %s178 = sphi 0, %s178
    %s180 = sphi 0, %s178
    %s181 = sphi 0, %s180
    %s195 = sphi 0, %s181
  $region4: #{tpu_custom_call.1} parent=0 // loop_header_branch
    %16 = sbr.rel (%p14) target = $region8
  $region5: #{tpu_custom_call.1} parent=0 // loop_body
    %s18 = ssub.s32 %s13, 1
    %s19 = ssub.s32 %s13, 2
    %s20 = sadd.s32 %s13, 1
    %s22 = sadd.s32 %s21, 1
    %p25 = scmp.eq.s32.totalorder %s13, 1
    %p26 = scmp.ne.s32.totalorder %s21, %s23
    %p27 = scmp.eq.s32.totalorder %s13, 0
    %p28 = por %p26, %p27
    %p29 = scmp.ne.s32.totalorder %s21, %s23
    %p30 = scmp.eq.s32.totalorder %s18, 1
    %p31 = por %p29, %p30
    %p32 = scmp.ne.s32.totalorder %s23, %s24
    %p33 = scmp.eq.s32.totalorder %s18, 0
    %p34 = por %p32, %p33
    %p35 = scmp.ne.s32.totalorder %s23, %s24
    %p36 = scmp.eq.s32.totalorder %s19, 1
    %p37 = por %p35, %p36
    %p39 = scmp.ne.s32.totalorder %s24, %s38
    %p40 = scmp.eq.s32.totalorder %s19, 0
    %p41 = por %p39, %p40
    %s43 = sadd.s32 %s42, 1
    %p46 = scmp.eq.s32.totalorder %s13, 1
    %p47 = scmp.ne.s32.totalorder %s42, %s44
    %p48 = scmp.eq.s32.totalorder %s13, 0
    %p49 = por %p47, %p48
    %p50 = scmp.ne.s32.totalorder %s42, %s44
    %p51 = scmp.eq.s32.totalorder %s18, 1
    %p52 = por %p50, %p51
    %p53 = scmp.ne.s32.totalorder %s44, %s45
    %p54 = scmp.eq.s32.totalorder %s18, 0
    %p55 = por %p53, %p54
    %p56 = scmp.ne.s32.totalorder %s44, %s45
    %p57 = scmp.eq.s32.totalorder %s19, 1
    %p58 = por %p56, %p57
    %p60 = scmp.ne.s32.totalorder %s45, %s59
    %p61 = scmp.eq.s32.totalorder %s19, 0
    %p62 = por %p60, %p61
    %s64 = sadd.s32 %s63, 1
    %p67 = scmp.eq.s32.totalorder %s13, 1
    %p68 = scmp.ne.s32.totalorder %s63, %s65
    %p69 = scmp.eq.s32.totalorder %s13, 0
    %p70 = por %p68, %p69
    %p71 = scmp.ne.s32.totalorder %s63, %s65
    %p72 = scmp.eq.s32.totalorder %s18, 1
    %p73 = por %p71, %p72
    %p74 = scmp.ne.s32.totalorder %s65, %s66
    %p75 = scmp.eq.s32.totalorder %s18, 0
    %p76 = por %p74, %p75
    %p77 = scmp.ne.s32.totalorder %s65, %s66
    %p78 = scmp.eq.s32.totalorder %s19, 1
    %p79 = por %p77, %p78
    %p81 = scmp.ne.s32.totalorder %s66, %s80
    %p82 = scmp.eq.s32.totalorder %s19, 0
    %p83 = por %p81, %p82
    %s85 = sadd.s32 %s84, 1
    %p88 = scmp.eq.s32.totalorder %s13, 1
    %p89 = scmp.ne.s32.totalorder %s84, %s86
    %p90 = scmp.eq.s32.totalorder %s13, 0
    %p91 = por %p89, %p90
    %p92 = scmp.ne.s32.totalorder %s84, %s86
    %p93 = scmp.eq.s32.totalorder %s18, 1
    %p94 = por %p92, %p93
    %p95 = scmp.ne.s32.totalorder %s86, %s87
    %p96 = scmp.eq.s32.totalorder %s18, 0
    %p97 = por %p95, %p96
    %p98 = scmp.ne.s32.totalorder %s86, %s87
    %p99 = scmp.eq.s32.totalorder %s19, 1
    %p100 = por %p98, %p99
    %p102 = scmp.ne.s32.totalorder %s87, %s101
    %p103 = scmp.eq.s32.totalorder %s19, 0
    %p104 = por %p102, %p103
    %s106 = sadd.s32 %s105, 1
    %p109 = scmp.eq.s32.totalorder %s13, 1
    %p110 = scmp.ne.s32.totalorder %s105, %s107
    %p111 = scmp.eq.s32.totalorder %s13, 0
    %p112 = por %p110, %p111
    %p113 = scmp.ne.s32.totalorder %s105, %s107
    %p114 = scmp.eq.s32.totalorder %s18, 1
    %p115 = por %p113, %p114
    %p116 = scmp.ne.s32.totalorder %s107, %s108
    %p117 = scmp.eq.s32.totalorder %s18, 0
    %p118 = por %p116, %p117
    %p119 = scmp.ne.s32.totalorder %s107, %s108
    %p120 = scmp.eq.s32.totalorder %s19, 1
    %p121 = por %p119, %p120
    %p123 = scmp.ne.s32.totalorder %s108, %s122
    %p124 = scmp.eq.s32.totalorder %s19, 0
    %p125 = por %p123, %p124
    %s126 = ssub.s32 %s13, %s20
    %p127 = scmp.eq.s32.totalorder %s126, 0
    %s129 = sadd.s32 %s128, 1
    %s130 = scalar_select %p127, %s128, %s129
    %p133 = pneg %p127
    %p134 = scmp.eq.s32.totalorder %s13, 1
    %p135 = por %p133, %p134
    %p136 = scmp.ne.s32.totalorder %s128, %s131
    %p137 = scmp.eq.s32.totalorder %s13, 0
    %p138 = por %p136, %p137
    %p139 = scmp.ne.s32.totalorder %s128, %s131
    %p140 = scmp.eq.s32.totalorder %s18, 1
    %p141 = por %p139, %p140
    %p142 = scmp.ne.s32.totalorder %s131, %s132
    %p143 = scmp.eq.s32.totalorder %s18, 0
    %p144 = por %p142, %p143
    %p145 = scmp.ne.s32.totalorder %s131, %s132
    %p146 = scmp.eq.s32.totalorder %s19, 1
    %p147 = por %p145, %p146
    %p149 = scmp.ne.s32.totalorder %s132, %s148
    %p150 = scmp.eq.s32.totalorder %s19, 0
    %p151 = por %p149, %p150
    %s152 = ssub.s32 %s13, %s20
    %p153 = scmp.eq.s32.totalorder %s152, 0
    %s155 = sadd.s32 %s154, 1
    %s156 = scalar_select %p153, %s154, %s155
    %p159 = pneg %p153
    %p160 = scmp.eq.s32.totalorder %s13, 1
    %p161 = por %p159, %p160
    %p162 = scmp.ne.s32.totalorder %s154, %s157
    %p163 = scmp.eq.s32.totalorder %s13, 0
    %p164 = por %p162, %p163
    %p165 = scmp.ne.s32.totalorder %s154, %s157
    %p166 = scmp.eq.s32.totalorder %s18, 1
    %p167 = por %p165, %p166
    %p168 = scmp.ne.s32.totalorder %s157, %s158
    %p169 = scmp.eq.s32.totalorder %s18, 0
    %p170 = por %p168, %p169
    %p171 = scmp.ne.s32.totalorder %s157, %s158
    %p172 = scmp.eq.s32.totalorder %s19, 1
    %p173 = por %p171, %p172
    %p175 = scmp.ne.s32.totalorder %s158, %s174
    %p176 = scmp.eq.s32.totalorder %s19, 0
    %p177 = por %p175, %p176
    %s179 = sadd.s32 %s178, 1
    %p182 = scmp.eq.s32.totalorder %s13, 1
    %p183 = scmp.ne.s32.totalorder %s178, %s180
    %p184 = scmp.eq.s32.totalorder %s13, 0
    %p185 = por %p183, %p184
    %p186 = scmp.ne.s32.totalorder %s178, %s180
    %p187 = scmp.eq.s32.totalorder %s18, 1
    %p188 = por %p186, %p187
    %p189 = scmp.ne.s32.totalorder %s180, %s181
    %p190 = scmp.eq.s32.totalorder %s18, 0
    %p191 = por %p189, %p190
    %p192 = scmp.ne.s32.totalorder %s180, %s181
    %p193 = scmp.eq.s32.totalorder %s19, 1
    %p194 = por %p192, %p193
    %p196 = scmp.ne.s32.totalorder %s181, %s195
    %p197 = scmp.eq.s32.totalorder %s19, 0
    %p198 = por %p196, %p197
    %p199 = scmp.le.s32.totalorder 1, %s13
    %p200 = scmp.lt.s32.totalorder %s13, 3
    %p201 = pnand %p199, %p200
    %p202 = pneg %p201
    // Predicated region
    $region9: #{tpu_custom_call.1} parent=5 // pred_check
      _
    $region10: #{tpu_custom_call.1} parent=5 // pred_check_branch
      %204 = sbr.rel (%p201) target = $region12
    $region11: #{tpu_custom_call.1} parent=5 // pred_region
      %s205 = ssub.s32 %s13, 1
      // Predicated region
      $region13: #{tpu_custom_call.1} parent=11 // pred_check
        %p206 = pneg %p34
      $region14: #{tpu_custom_call.1} parent=11 // pred_check_branch
        %208 = sbr.rel (%p206) target = $region16
      $region15: #{tpu_custom_call.1} parent=11 // pred_region
        _
      $region16: #{tpu_custom_call.1} parent=11 // pred_fallthru
        _
      // Predicated region
      $region17: #{tpu_custom_call.1} parent=11 // pred_check
        %p209 = pneg %p55
      $region18: #{tpu_custom_call.1} parent=11 // pred_check_branch
        %211 = sbr.rel (%p209) target = $region20
      $region19: #{tpu_custom_call.1} parent=11 // pred_region
        _
      $region20: #{tpu_custom_call.1} parent=11 // pred_fallthru
        _
      // Predicated region
      $region21: #{tpu_custom_call.1} parent=11 // pred_check
        %p212 = pneg %p76
      $region22: #{tpu_custom_call.1} parent=11 // pred_check_branch
        %214 = sbr.rel (%p212) target = $region24
      $region23: #{tpu_custom_call.1} parent=11 // pred_region
        _
      $region24: #{tpu_custom_call.1} parent=11 // pred_fallthru
        _
      // Predicated region
      $region25: #{tpu_custom_call.1} parent=11 // pred_check
        %p215 = pneg %p97
      $region26: #{tpu_custom_call.1} parent=11 // pred_check_branch
        %217 = sbr.rel (%p215) target = $region28
      $region27: #{tpu_custom_call.1} parent=11 // pred_region
        _
      $region28: #{tpu_custom_call.1} parent=11 // pred_fallthru
        _
      // Predicated region
      $region29: #{tpu_custom_call.1} parent=11 // pred_check
        %p218 = pneg %p118
      $region30: #{tpu_custom_call.1} parent=11 // pred_check_branch
        %220 = sbr.rel (%p218) target = $region32
      $region31: #{tpu_custom_call.1} parent=11 // pred_region
        _
      $region32: #{tpu_custom_call.1} parent=11 // pred_fallthru
        _
    $region12: #{tpu_custom_call.1} parent=5 // pred_fallthru
      _
    %p221 = scmp.lt.s32.totalorder %s13, 2
    // Predicated region
    $region33: #{tpu_custom_call.1} parent=5 // pred_check
      %p222 = pneg %p221
    $region34: #{tpu_custom_call.1} parent=5 // pred_check_branch
      %224 = sbr.rel (%p222) target = $region36
    $region35: #{tpu_custom_call.1} parent=5 // pred_region
      // Predicated region
      $region37: #{tpu_custom_call.1} parent=35 // pred_check
        %p225 = pneg %p138
      $region38: #{tpu_custom_call.1} parent=35 // pred_check_branch
        %227 = sbr.rel (%p225) target = $region40
      $region39: #{tpu_custom_call.1} parent=35 // pred_region
        %s228 = smul.u32 16, %s13
        %p229 = scmp.lt.s32.totalorder %s228, 31
        %s230 = scalar_select %p229, %s228, 31
        %s231 = smul.addr %s230, 2
        %s232 = smul.addr %s231, 4
        %s233 = scalar_lea.vmem %s5, %s232
        %s234 = smul.u32 16, %s13
      $region40: #{tpu_custom_call.1} parent=35 // pred_fallthru
        _
      // Predicated region
      $region41: #{tpu_custom_call.1} parent=35 // pred_check
        %p235 = pneg %p164
      $region42: #{tpu_custom_call.1} parent=35 // pred_check_branch
        %237 = sbr.rel (%p235) target = $region44
      $region43: #{tpu_custom_call.1} parent=35 // pred_region
        %s238 = smul.u32 16, %s13
        %p239 = scmp.lt.s32.totalorder %s238, 31
        %s240 = scalar_select %p239, %s238, 31
        %s241 = smul.addr %s240, 2
        %s242 = smul.addr %s241, 8
        %s243 = scalar_lea.vmem %s6, %s242
        %s244 = smul.u32 16, %s13
      $region44: #{tpu_custom_call.1} parent=35 // pred_fallthru
        _
    $region36: #{tpu_custom_call.1} parent=5 // pred_fallthru
      _
    %p245 = scmp.le.s32.totalorder 1, %s13
    %p246 = scmp.lt.s32.totalorder %s13, 3
    %p247 = pnand %p245, %p246
    %p248 = pneg %p247
    // Predicated region
    $region45: #{tpu_custom_call.1} parent=5 // pred_check
      _
    $region46: #{tpu_custom_call.1} parent=5 // pred_check_branch
      %250 = sbr.rel (%p247) target = $region48
    $region47: #{tpu_custom_call.1} parent=5 // pred_region
      %s251 = ssub.s32 %s13, 1
      %p252 = pneg %p34
      %p253 = pneg %p31
      %p254 = pneg %p55
      %p255 = pneg %p52
      %p256 = pneg %p76
      %p257 = pneg %p73
      %p258 = pneg %p97
      %p259 = pneg %p94
      %p260 = pneg %p118
      %p261 = pneg %p115
      %s262 = smul.u32 16, %s18
      %p263 = scmp.lt.s32.totalorder %s262, 31
      %s264 = scalar_select %p263, %s262, 31
      %s265 = smul.addr %s264, 2
      %s266 = smul.addr %s265, 4
      %s267 = scalar_lea.vmem %s5, %s266
      %p268 = pneg %p144
      %p269 = pneg %p141
      %s270 = smul.u32 16, %s18
      %p271 = scmp.lt.s32.totalorder %s270, 31
      %s272 = scalar_select %p271, %s270, 31
      %s273 = smul.addr %s272, 2
      %s274 = smul.addr %s273, 8
      %s275 = scalar_lea.vmem %s6, %s274
      %p276 = pneg %p170
      %p277 = pneg %p167
      %p278 = pneg %p191
      %p279 = pneg %p188
      %s280 = smul.u32 16, %s18
      %p281 = scmp.lt.s32.totalorder %s280, 31
      %s282 = scalar_select %p281, %s280, 31
      %s283 = smul.addr %s282, 2
      %s284 = smul.addr %s283, 4
      %s285 = scalar_lea.vmem %s5, %s284
      %s286 = smul.u32 16, %s18
      %s287 = smul.u32 16, %s18
      %p288 = scmp.lt.s32.totalorder %s287, 31
      %s289 = scalar_select %p288, %s287, 31
      %s290 = smul.addr %s289, 2
      %s291 = smul.addr %s290, 8
      %s292 = scalar_lea.vmem %s6, %s291
      %s293 = smul.u32 16, %s18
      %p294 = scmp.eq.s32.totalorder %s18, 0
      // Predicated region
      $region49: #{tpu_custom_call.1} parent=47 // pred_check
        %p295 = pneg %p294
      $region50: #{tpu_custom_call.1} parent=47 // pred_check_branch
        %297 = sbr.rel (%p295) target = $region52
      $region51: #{tpu_custom_call.1} parent=47 // pred_region
        %v298 = vld [vmem:[%s1] sm:$0xff]
        %v299 = vld [vmem:[%s1 + $0x8] sm:$0xff]
        %v300 = vld [vmem:[%s1 + $0x10] sm:$0xff]
        %v301 = vld [vmem:[%s1 + $0x18] sm:$0xff]
        %v302 = vld [vmem:[%s1 + $0x20] sm:$0xff]
        %v303 = vld [vmem:[%s1 + $0x28] sm:$0xff]
        %v304 = vld [vmem:[%s1 + $0x30] sm:$0xff]
        %v305 = vld [vmem:[%s1 + $0x38] sm:$0xff]
        %v306 = vld [vmem:[%s1 + $0x40] sm:$0xff]
        %v307 = vld [vmem:[%s1 + $0x48] sm:$0xff]
        %v308 = vld [vmem:[%s1 + $0x50] sm:$0xff]
        %v309 = vld [vmem:[%s1 + $0x58] sm:$0xff]
        %v310 = vld [vmem:[%s1 + $0x60] sm:$0xff]
        %v311 = vld [vmem:[%s1 + $0x68] sm:$0xff]
        %v312 = vld [vmem:[%s1 + $0x70] sm:$0xff]
        %v313 = vld [vmem:[%s1 + $0x78] sm:$0xff]
        %v314 = vld [vmem:[%s1 + $0x80] sm:$0xff]
        %v315 = vld [vmem:[%s1 + $0x88] sm:$0xff]
        %v316 = vld [vmem:[%s1 + $0x90] sm:$0xff]
        %v317 = vld [vmem:[%s1 + $0x98] sm:$0xff]
        %v318 = vld [vmem:[%s1 + $0xa0] sm:$0xff]
        %v319 = vld [vmem:[%s1 + $0xa8] sm:$0xff]
        %v320 = vld [vmem:[%s1 + $0xb0] sm:$0xff]
        %v321 = vld [vmem:[%s1 + $0xb8] sm:$0xff]
        %v322 = vld [vmem:[%s1 + $0xc0] sm:$0xff]
        %v323 = vld [vmem:[%s1 + $0xc8] sm:$0xff]
        %v324 = vld [vmem:[%s1 + $0xd0] sm:$0xff]
        %v325 = vld [vmem:[%s1 + $0xd8] sm:$0xff]
        %v326 = vld [vmem:[%s1 + $0xe0] sm:$0xff]
        %v327 = vld [vmem:[%s1 + $0xe8] sm:$0xff]
        %v328 = vld [vmem:[%s1 + $0xf0] sm:$0xff]
        %v329 = vld [vmem:[%s1 + $0xf8] sm:$0xff]
        %v330 = vld [vmem:[%s1 + $0x100] sm:$0xff]
        %v331 = vld [vmem:[%s1 + $0x108] sm:$0xff]
        %v332 = vld [vmem:[%s1 + $0x110] sm:$0xff]
        %v333 = vld [vmem:[%s1 + $0x118] sm:$0xff]
        %v334 = vld [vmem:[%s1 + $0x120] sm:$0xff]
        %v335 = vld [vmem:[%s1 + $0x128] sm:$0xff]
        %v336 = vld [vmem:[%s1 + $0x130] sm:$0xff]
        %v337 = vld [vmem:[%s1 + $0x138] sm:$0xff]
        %v338 = vld [vmem:[%s1 + $0x140] sm:$0xff]
        %v339 = vld [vmem:[%s1 + $0x148] sm:$0xff]
        %v340 = vld [vmem:[%s1 + $0x150] sm:$0xff]
        %v341 = vld [vmem:[%s1 + $0x158] sm:$0xff]
        %v342 = vld [vmem:[%s1 + $0x160] sm:$0xff]
        %v343 = vld [vmem:[%s1 + $0x168] sm:$0xff]
        %v344 = vld [vmem:[%s1 + $0x170] sm:$0xff]
        %v345 = vld [vmem:[%s1 + $0x178] sm:$0xff]
        %v346 = vld [vmem:[%s1 + $0x180] sm:$0xff]
        %v347 = vld [vmem:[%s1 + $0x188] sm:$0xff]
        %v348 = vld [vmem:[%s1 + $0x190] sm:$0xff]
        %v349 = vld [vmem:[%s1 + $0x198] sm:$0xff]
        %v350 = vld [vmem:[%s1 + $0x1a0] sm:$0xff]
        %v351 = vld [vmem:[%s1 + $0x1a8] sm:$0xff]
        %v352 = vld [vmem:[%s1 + $0x1b0] sm:$0xff]
        %v353 = vld [vmem:[%s1 + $0x1b8] sm:$0xff]
        %v354 = vld [vmem:[%s1 + $0x1c0] sm:$0xff]
        %v355 = vld [vmem:[%s1 + $0x1c8] sm:$0xff]
        %v356 = vld [vmem:[%s1 + $0x1d0] sm:$0xff]
        %v357 = vld [vmem:[%s1 + $0x1d8] sm:$0xff]
        %v358 = vld [vmem:[%s1 + $0x1e0] sm:$0xff]
        %v359 = vld [vmem:[%s1 + $0x1e8] sm:$0xff]
        %v360 = vld [vmem:[%s1 + $0x1f0] sm:$0xff]
        %v361 = vld [vmem:[%s1 + $0x1f8] sm:$0xff]
        %v362 = vld [vmem:[%s0] sm:$0xff]
        %v363 = vld [vmem:[%s0 + $0x8] sm:$0xff]
        %v364 = vld [vmem:[%s0 + $0x10] sm:$0xff]
        %v365 = vld [vmem:[%s0 + $0x18] sm:$0xff]
        %v366 = vld [vmem:[%s0 + $0x20] sm:$0xff]
        %v367 = vld [vmem:[%s0 + $0x28] sm:$0xff]
        %v368 = vld [vmem:[%s0 + $0x30] sm:$0xff]
        %v369 = vld [vmem:[%s0 + $0x38] sm:$0xff]
        %v370 = vld [vmem:[%s0 + $0x40] sm:$0xff]
        %v371 = vld [vmem:[%s0 + $0x48] sm:$0xff]
        %v372 = vld [vmem:[%s0 + $0x50] sm:$0xff]
        %v373 = vld [vmem:[%s0 + $0x58] sm:$0xff]
        %v374 = vld [vmem:[%s0 + $0x60] sm:$0xff]
        %v375 = vld [vmem:[%s0 + $0x68] sm:$0xff]
        %v376 = vld [vmem:[%s0 + $0x70] sm:$0xff]
        %v377 = vld [vmem:[%s0 + $0x78] sm:$0xff]
        %v378 = vld [vmem:[%s0 + $0x80] sm:$0xff]
        %v379 = vld [vmem:[%s0 + $0x88] sm:$0xff]
        %v380 = vld [vmem:[%s0 + $0x90] sm:$0xff]
        %v381 = vld [vmem:[%s0 + $0x98] sm:$0xff]
        %v382 = vld [vmem:[%s0 + $0xa0] sm:$0xff]
        %v383 = vld [vmem:[%s0 + $0xa8] sm:$0xff]
        %v384 = vld [vmem:[%s0 + $0xb0] sm:$0xff]
        %v385 = vld [vmem:[%s0 + $0xb8] sm:$0xff]
        %v386 = vld [vmem:[%s0 + $0xc0] sm:$0xff]
        %v387 = vld [vmem:[%s0 + $0xc8] sm:$0xff]
        %v388 = vld [vmem:[%s0 + $0xd0] sm:$0xff]
        %v389 = vld [vmem:[%s0 + $0xd8] sm:$0xff]
        %v390 = vld [vmem:[%s0 + $0xe0] sm:$0xff]
        %v391 = vld [vmem:[%s0 + $0xe8] sm:$0xff]
        %v392 = vld [vmem:[%s0 + $0xf0] sm:$0xff]
        %v393 = vld [vmem:[%s0 + $0xf8] sm:$0xff]
        %395 = vset.pattern.permute.xlu0 0
        %396 = vperm.xlu0 %395, %v362
        %v397 = vpop.permute.xlu0 %396
        %400 = vset.pattern.permute.xlu0 0
        %401 = vperm.xlu0 %400, %v363
        %v402 = vpop.permute.xlu0 %401
        %405 = vset.pattern.permute.xlu0 0
        %406 = vperm.xlu0 %405, %v364
        %v407 = vpop.permute.xlu0 %406
        %410 = vset.pattern.permute.xlu0 0
        %411 = vperm.xlu0 %410, %v365
        %v412 = vpop.permute.xlu0 %411
        %415 = vset.pattern.permute.xlu0 0
        %416 = vperm.xlu0 %415, %v366
        %v417 = vpop.permute.xlu0 %416
        %420 = vset.pattern.permute.xlu0 0
        %421 = vperm.xlu0 %420, %v367
        %v422 = vpop.permute.xlu0 %421
        %425 = vset.pattern.permute.xlu0 0
        %426 = vperm.xlu0 %425, %v368
        %v427 = vpop.permute.xlu0 %426
        %430 = vset.pattern.permute.xlu0 0
        %431 = vperm.xlu0 %430, %v369
        %v432 = vpop.permute.xlu0 %431
        %435 = vset.pattern.permute.xlu0 0
        %436 = vperm.xlu0 %435, %v370
        %v437 = vpop.permute.xlu0 %436
        %440 = vset.pattern.permute.xlu0 0
        %441 = vperm.xlu0 %440, %v371
        %v442 = vpop.permute.xlu0 %441
        %445 = vset.pattern.permute.xlu0 0
        %446 = vperm.xlu0 %445, %v372
        %v447 = vpop.permute.xlu0 %446
        %450 = vset.pattern.permute.xlu0 0
        %451 = vperm.xlu0 %450, %v373
        %v452 = vpop.permute.xlu0 %451
        %455 = vset.pattern.permute.xlu0 0
        %456 = vperm.xlu0 %455, %v374
        %v457 = vpop.permute.xlu0 %456
        %460 = vset.pattern.permute.xlu0 0
        %461 = vperm.xlu0 %460, %v375
        %v462 = vpop.permute.xlu0 %461
        %465 = vset.pattern.permute.xlu0 0
        %466 = vperm.xlu0 %465, %v376
        %v467 = vpop.permute.xlu0 %466
        %470 = vset.pattern.permute.xlu0 0
        %471 = vperm.xlu0 %470, %v377
        %v472 = vpop.permute.xlu0 %471
        %475 = vset.pattern.permute.xlu0 0
        %476 = vperm.xlu0 %475, %v378
        %v477 = vpop.permute.xlu0 %476
        %480 = vset.pattern.permute.xlu0 0
        %481 = vperm.xlu0 %480, %v379
        %v482 = vpop.permute.xlu0 %481
        %485 = vset.pattern.permute.xlu0 0
        %486 = vperm.xlu0 %485, %v380
        %v487 = vpop.permute.xlu0 %486
        %490 = vset.pattern.permute.xlu0 0
        %491 = vperm.xlu0 %490, %v381
        %v492 = vpop.permute.xlu0 %491
        %495 = vset.pattern.permute.xlu0 0
        %496 = vperm.xlu0 %495, %v382
        %v497 = vpop.permute.xlu0 %496
        %500 = vset.pattern.permute.xlu0 0
        %501 = vperm.xlu0 %500, %v383
        %v502 = vpop.permute.xlu0 %501
        %505 = vset.pattern.permute.xlu0 0
        %506 = vperm.xlu0 %505, %v384
        %v507 = vpop.permute.xlu0 %506
        %510 = vset.pattern.permute.xlu0 0
        %511 = vperm.xlu0 %510, %v385
        %v512 = vpop.permute.xlu0 %511
        %515 = vset.pattern.permute.xlu0 0
        %516 = vperm.xlu0 %515, %v386
        %v517 = vpop.permute.xlu0 %516
        %520 = vset.pattern.permute.xlu0 0
        %521 = vperm.xlu0 %520, %v387
        %v522 = vpop.permute.xlu0 %521
        %525 = vset.pattern.permute.xlu0 0
        %526 = vperm.xlu0 %525, %v388
        %v527 = vpop.permute.xlu0 %526
        %530 = vset.pattern.permute.xlu0 0
        %531 = vperm.xlu0 %530, %v389
        %v532 = vpop.permute.xlu0 %531
        %535 = vset.pattern.permute.xlu0 0
        %536 = vperm.xlu0 %535, %v390
        %v537 = vpop.permute.xlu0 %536
        %540 = vset.pattern.permute.xlu0 0
        %541 = vperm.xlu0 %540, %v391
        %v542 = vpop.permute.xlu0 %541
        %545 = vset.pattern.permute.xlu0 0
        %546 = vperm.xlu0 %545, %v392
        %v547 = vpop.permute.xlu0 %546
        %550 = vset.pattern.permute.xlu0 0
        %551 = vperm.xlu0 %550, %v393
        %v552 = vpop.permute.xlu0 %551
        %v554 = vmul.f32 %v298, %v397
        %v555 = vmul.f32 %v299, %v397
        %v556 = vmul.f32 %v300, %v402
        %v557 = vmul.f32 %v301, %v402
        %v558 = vmul.f32 %v302, %v407
        %v559 = vmul.f32 %v303, %v407
        %v560 = vmul.f32 %v304, %v412
        %v561 = vmul.f32 %v305, %v412
        %v562 = vmul.f32 %v306, %v417
        %v563 = vmul.f32 %v307, %v417
        %v564 = vmul.f32 %v308, %v422
        %v565 = vmul.f32 %v309, %v422
        %v566 = vmul.f32 %v310, %v427
        %v567 = vmul.f32 %v311, %v427
        %v568 = vmul.f32 %v312, %v432
        %v569 = vmul.f32 %v313, %v432
        %v570 = vmul.f32 %v314, %v437
        %v571 = vmul.f32 %v315, %v437
        %v572 = vmul.f32 %v316, %v442
        %v573 = vmul.f32 %v317, %v442
        %v574 = vmul.f32 %v318, %v447
        %v575 = vmul.f32 %v319, %v447
        %v576 = vmul.f32 %v320, %v452
        %v577 = vmul.f32 %v321, %v452
        %v578 = vmul.f32 %v322, %v457
        %v579 = vmul.f32 %v323, %v457
        %v580 = vmul.f32 %v324, %v462
        %v581 = vmul.f32 %v325, %v462
        %v582 = vmul.f32 %v326, %v467
        %v583 = vmul.f32 %v327, %v467
        %v584 = vmul.f32 %v328, %v472
        %v585 = vmul.f32 %v329, %v472
        %v586 = vmul.f32 %v330, %v477
        %v587 = vmul.f32 %v331, %v477
        %v588 = vmul.f32 %v332, %v482
        %v589 = vmul.f32 %v333, %v482
        %v590 = vmul.f32 %v334, %v487
        %v591 = vmul.f32 %v335, %v487
        %v592 = vmul.f32 %v336, %v492
        %v593 = vmul.f32 %v337, %v492
        %v594 = vmul.f32 %v338, %v497
        %v595 = vmul.f32 %v339, %v497
        %v596 = vmul.f32 %v340, %v502
        %v597 = vmul.f32 %v341, %v502
        %v598 = vmul.f32 %v342, %v507
        %v599 = vmul.f32 %v343, %v507
        %v600 = vmul.f32 %v344, %v512
        %v601 = vmul.f32 %v345, %v512
        %v602 = vmul.f32 %v346, %v517
        %v603 = vmul.f32 %v347, %v517
        %v604 = vmul.f32 %v348, %v522
        %v605 = vmul.f32 %v349, %v522
        %v606 = vmul.f32 %v350, %v527
        %v607 = vmul.f32 %v351, %v527
        %v608 = vmul.f32 %v352, %v532
        %v609 = vmul.f32 %v353, %v532
        %v610 = vmul.f32 %v354, %v537
        %v611 = vmul.f32 %v355, %v537
        %v612 = vmul.f32 %v356, %v542
        %v613 = vmul.f32 %v357, %v542
        %v614 = vmul.f32 %v358, %v547
        %v615 = vmul.f32 %v359, %v547
        %v616 = vmul.f32 %v360, %v552
        %v617 = vmul.f32 %v361, %v552
        %v618 = vpack.c.bf16 %v556, %v554
        %v619 = vpack.c.bf16 %v557, %v555
        %v620 = vpack.c.bf16 %v560, %v558
        %v621 = vpack.c.bf16 %v561, %v559
        %v622 = vpack.c.bf16 %v564, %v562
        %v623 = vpack.c.bf16 %v565, %v563
        %v624 = vpack.c.bf16 %v568, %v566
        %v625 = vpack.c.bf16 %v569, %v567
        %v626 = vpack.c.bf16 %v572, %v570
        %v627 = vpack.c.bf16 %v573, %v571
        %v628 = vpack.c.bf16 %v576, %v574
        %v629 = vpack.c.bf16 %v577, %v575
        %v630 = vpack.c.bf16 %v580, %v578
        %v631 = vpack.c.bf16 %v581, %v579
        %v632 = vpack.c.bf16 %v584, %v582
        %v633 = vpack.c.bf16 %v585, %v583
        %v634 = vpack.c.bf16 %v588, %v586
        %v635 = vpack.c.bf16 %v589, %v587
        %v636 = vpack.c.bf16 %v592, %v590
        %v637 = vpack.c.bf16 %v593, %v591
        %v638 = vpack.c.bf16 %v596, %v594
        %v639 = vpack.c.bf16 %v597, %v595
        %v640 = vpack.c.bf16 %v600, %v598
        %v641 = vpack.c.bf16 %v601, %v599
        %v642 = vpack.c.bf16 %v604, %v602
        %v643 = vpack.c.bf16 %v605, %v603
        %v644 = vpack.c.bf16 %v608, %v606
        %v645 = vpack.c.bf16 %v609, %v607
        %v646 = vpack.c.bf16 %v612, %v610
        %v647 = vpack.c.bf16 %v613, %v611
        %v648 = vpack.c.bf16 %v616, %v614
        %v649 = vpack.c.bf16 %v617, %v615
        %v682 = vunpack.c.l.b16 %v618
        %v683 = vunpack.c.l.b16 %v619
        %v684 = vunpack.c.h.b16 %v618
        %v685 = vunpack.c.h.b16 %v619
        %v686 = vunpack.c.l.b16 %v620
        %v687 = vunpack.c.l.b16 %v621
        %v688 = vunpack.c.h.b16 %v620
        %v689 = vunpack.c.h.b16 %v621
        %v690 = vunpack.c.l.b16 %v622
        %v691 = vunpack.c.l.b16 %v623
        %v692 = vunpack.c.h.b16 %v622
        %v693 = vunpack.c.h.b16 %v623
        %v694 = vunpack.c.l.b16 %v624
        %v695 = vunpack.c.l.b16 %v625
        %v696 = vunpack.c.h.b16 %v624
        %v697 = vunpack.c.h.b16 %v625
        %v698 = vunpack.c.l.b16 %v626
        %v699 = vunpack.c.l.b16 %v627
        %v700 = vunpack.c.h.b16 %v626
        %v701 = vunpack.c.h.b16 %v627
        %v702 = vunpack.c.l.b16 %v628
        %v703 = vunpack.c.l.b16 %v629
        %v704 = vunpack.c.h.b16 %v628
        %v705 = vunpack.c.h.b16 %v629
        %v706 = vunpack.c.l.b16 %v630
        %v707 = vunpack.c.l.b16 %v631
        %v708 = vunpack.c.h.b16 %v630
        %v709 = vunpack.c.h.b16 %v631
        %v710 = vunpack.c.l.b16 %v632
        %v711 = vunpack.c.l.b16 %v633
        %v712 = vunpack.c.h.b16 %v632
        %v713 = vunpack.c.h.b16 %v633
        %v714 = vunpack.c.l.b16 %v634
        %v715 = vunpack.c.l.b16 %v635
        %v716 = vunpack.c.h.b16 %v634
        %v717 = vunpack.c.h.b16 %v635
        %v718 = vunpack.c.l.b16 %v636
        %v719 = vunpack.c.l.b16 %v637
        %v720 = vunpack.c.h.b16 %v636
        %v721 = vunpack.c.h.b16 %v637
        %v722 = vunpack.c.l.b16 %v638
        %v723 = vunpack.c.l.b16 %v639
        %v724 = vunpack.c.h.b16 %v638
        %v725 = vunpack.c.h.b16 %v639
        %v726 = vunpack.c.l.b16 %v640
        %v727 = vunpack.c.l.b16 %v641
        %v728 = vunpack.c.h.b16 %v640
        %v729 = vunpack.c.h.b16 %v641
        %v730 = vunpack.c.l.b16 %v642
        %v731 = vunpack.c.l.b16 %v643
        %v732 = vunpack.c.h.b16 %v642
        %v733 = vunpack.c.h.b16 %v643
        %v734 = vunpack.c.l.b16 %v644
        %v735 = vunpack.c.l.b16 %v645
        %v736 = vunpack.c.h.b16 %v644
        %v737 = vunpack.c.h.b16 %v645
        %v738 = vunpack.c.l.b16 %v646
        %v739 = vunpack.c.l.b16 %v647
        %v740 = vunpack.c.h.b16 %v646
        %v741 = vunpack.c.h.b16 %v647
        %v742 = vunpack.c.l.b16 %v648
        %v743 = vunpack.c.l.b16 %v649
        %v744 = vunpack.c.h.b16 %v648
        %v745 = vunpack.c.h.b16 %v649
        %v746 = vpack.c.b16 %v683, %v682
        %v747 = vpack.c.b16 %v685, %v684
        %v748 = vpack.c.b16 %v687, %v686
        %v749 = vpack.c.b16 %v689, %v688
        %v750 = vpack.c.b16 %v691, %v690
        %v751 = vpack.c.b16 %v693, %v692
        %v752 = vpack.c.b16 %v695, %v694
        %v753 = vpack.c.b16 %v697, %v696
        %v754 = vpack.c.b16 %v699, %v698
        %v755 = vpack.c.b16 %v701, %v700
        %v756 = vpack.c.b16 %v703, %v702
        %v757 = vpack.c.b16 %v705, %v704
        %v758 = vpack.c.b16 %v707, %v706
        %v759 = vpack.c.b16 %v709, %v708
        %v760 = vpack.c.b16 %v711, %v710
        %v761 = vpack.c.b16 %v713, %v712
        %v762 = vpack.c.b16 %v715, %v714
        %v763 = vpack.c.b16 %v717, %v716
        %v764 = vpack.c.b16 %v719, %v718
        %v765 = vpack.c.b16 %v721, %v720
        %v766 = vpack.c.b16 %v723, %v722
        %v767 = vpack.c.b16 %v725, %v724
        %v768 = vpack.c.b16 %v727, %v726
        %v769 = vpack.c.b16 %v729, %v728
        %v770 = vpack.c.b16 %v731, %v730
        %v771 = vpack.c.b16 %v733, %v732
        %v772 = vpack.c.b16 %v735, %v734
        %v773 = vpack.c.b16 %v737, %v736
        %v774 = vpack.c.b16 %v739, %v738
        %v775 = vpack.c.b16 %v741, %v740
        %v776 = vpack.c.b16 %v743, %v742
        %v777 = vpack.c.b16 %v745, %v744
        %vm810 = vcmask 1043456
        %vm811 = vcmask 556036
        %vm812 = vmor %vm811, %vm810
        %813 = vst.msk [vmem:[#allocation2] sm:$0xff] %vm812, %v746
        %814 = vst.msk [vmem:[#allocation2 + $0x8] sm:$0xff] %vm812, %v747
        %815 = vst.msk [vmem:[#allocation2 + $0x10] sm:$0xff] %vm812, %v748
        %816 = vst.msk [vmem:[#allocation2 + $0x18] sm:$0xff] %vm812, %v749
        %817 = vst.msk [vmem:[#allocation2 + $0x20] sm:$0xff] %vm812, %v750
        %818 = vst.msk [vmem:[#allocation2 + $0x28] sm:$0xff] %vm812, %v751
        %819 = vst.msk [vmem:[#allocation2 + $0x30] sm:$0xff] %vm812, %v752
        %820 = vst.msk [vmem:[#allocation2 + $0x38] sm:$0xff] %vm812, %v753
        %821 = vst.msk [vmem:[#allocation2 + $0x40] sm:$0xff] %vm812, %v754
        %822 = vst.msk [vmem:[#allocation2 + $0x48] sm:$0xff] %vm812, %v755
        %823 = vst.msk [vmem:[#allocation2 + $0x50] sm:$0xff] %vm812, %v756
        %824 = vst.msk [vmem:[#allocation2 + $0x58] sm:$0xff] %vm812, %v757
        %825 = vst.msk [vmem:[#allocation2 + $0x60] sm:$0xff] %vm812, %v758
        %826 = vst.msk [vmem:[#allocation2 + $0x68] sm:$0xff] %vm812, %v759
        %827 = vst.msk [vmem:[#allocation2 + $0x70] sm:$0xff] %vm812, %v760
        %828 = vst.msk [vmem:[#allocation2 + $0x78] sm:$0xff] %vm812, %v761
        %829 = vst.msk [vmem:[#allocation2 + $0x80] sm:$0xff] %vm812, %v762
        %830 = vst.msk [vmem:[#allocation2 + $0x88] sm:$0xff] %vm812, %v763
        %831 = vst.msk [vmem:[#allocation2 + $0x90] sm:$0xff] %vm812, %v764
        %832 = vst.msk [vmem:[#allocation2 + $0x98] sm:$0xff] %vm812, %v765
        %833 = vst.msk [vmem:[#allocation2 + $0xa0] sm:$0xff] %vm812, %v766
        %834 = vst.msk [vmem:[#allocation2 + $0xa8] sm:$0xff] %vm812, %v767
        %835 = vst.msk [vmem:[#allocation2 + $0xb0] sm:$0xff] %vm812, %v768
        %836 = vst.msk [vmem:[#allocation2 + $0xb8] sm:$0xff] %vm812, %v769
        %837 = vst.msk [vmem:[#allocation2 + $0xc0] sm:$0xff] %vm812, %v770
        %838 = vst.msk [vmem:[#allocation2 + $0xc8] sm:$0xff] %vm812, %v771
        %839 = vst.msk [vmem:[#allocation2 + $0xd0] sm:$0xff] %vm812, %v772
        %840 = vst.msk [vmem:[#allocation2 + $0xd8] sm:$0xff] %vm812, %v773
        %841 = vst.msk [vmem:[#allocation2 + $0xe0] sm:$0xff] %vm812, %v774
        %842 = vst.msk [vmem:[#allocation2 + $0xe8] sm:$0xff] %vm812, %v775
        %843 = vst.msk [vmem:[#allocation2 + $0xf0] sm:$0xff] %vm812, %v776
        %844 = vst.msk [vmem:[#allocation2 + $0xf8] sm:$0xff] %vm812, %v777
      $region52: #{tpu_custom_call.1} parent=47 // pred_fallthru
        _
      %v845 = vld [vmem:[%s285] sm:$0xff]
      %v846 = vld [vmem:[%s285 + $0x8] sm:$0xff]
      %v847 = vld [vmem:[%s285 + $0x10] sm:$0xff]
      %v848 = vld [vmem:[%s285 + $0x18] sm:$0xff]
      %v849 = vld [vmem:[%s285 + $0x20] sm:$0xff]
      %v850 = vld [vmem:[%s285 + $0x28] sm:$0xff]
      %v851 = vld [vmem:[%s285 + $0x30] sm:$0xff]
      %v852 = vld [vmem:[%s285 + $0x38] sm:$0xff]
      %v853 = vld [vmem:[%s285 + $0x40] sm:$0xff]
      %v854 = vld [vmem:[%s285 + $0x48] sm:$0xff]
      %v855 = vld [vmem:[%s285 + $0x50] sm:$0xff]
      %v856 = vld [vmem:[%s285 + $0x58] sm:$0xff]
      %v857 = vld [vmem:[%s285 + $0x60] sm:$0xff]
      %v858 = vld [vmem:[%s285 + $0x68] sm:$0xff]
      %v859 = vld [vmem:[%s285 + $0x70] sm:$0xff]
      %v860 = vld [vmem:[%s285 + $0x78] sm:$0xff]
      %v861 = vld [vmem:[#allocation2] sm:$0xff]
      %v862 = vld [vmem:[#allocation2 + $0x8] sm:$0xff]
      %v863 = vld [vmem:[#allocation2 + $0x10] sm:$0xff]
      %v864 = vld [vmem:[#allocation2 + $0x18] sm:$0xff]
      %v865 = vld [vmem:[#allocation2 + $0x20] sm:$0xff]
      %v866 = vld [vmem:[#allocation2 + $0x28] sm:$0xff]
      %v867 = vld [vmem:[#allocation2 + $0x30] sm:$0xff]
      %v868 = vld [vmem:[#allocation2 + $0x38] sm:$0xff]
      %v869 = vld [vmem:[#allocation2 + $0x40] sm:$0xff]
      %v870 = vld [vmem:[#allocation2 + $0x48] sm:$0xff]
      %v871 = vld [vmem:[#allocation2 + $0x50] sm:$0xff]
      %v872 = vld [vmem:[#allocation2 + $0x58] sm:$0xff]
      %v873 = vld [vmem:[#allocation2 + $0x60] sm:$0xff]
      %v874 = vld [vmem:[#allocation2 + $0x68] sm:$0xff]
      %v875 = vld [vmem:[#allocation2 + $0x70] sm:$0xff]
      %v876 = vld [vmem:[#allocation2 + $0x78] sm:$0xff]
      %v877 = vld [vmem:[#allocation2 + $0x80] sm:$0xff]
      %v878 = vld [vmem:[#allocation2 + $0x88] sm:$0xff]
      %v879 = vld [vmem:[#allocation2 + $0x90] sm:$0xff]
      %v880 = vld [vmem:[#allocation2 + $0x98] sm:$0xff]
      %v881 = vld [vmem:[#allocation2 + $0xa0] sm:$0xff]
      %v882 = vld [vmem:[#allocation2 + $0xa8] sm:$0xff]
      %v883 = vld [vmem:[#allocation2 + $0xb0] sm:$0xff]
      %v884 = vld [vmem:[#allocation2 + $0xb8] sm:$0xff]
      %v885 = vld [vmem:[#allocation2 + $0xc0] sm:$0xff]
      %v886 = vld [vmem:[#allocation2 + $0xc8] sm:$0xff]
      %v887 = vld [vmem:[#allocation2 + $0xd0] sm:$0xff]
      %v888 = vld [vmem:[#allocation2 + $0xd8] sm:$0xff]
      %v889 = vld [vmem:[#allocation2 + $0xe0] sm:$0xff]
      %v890 = vld [vmem:[#allocation2 + $0xe8] sm:$0xff]
      %v891 = vld [vmem:[#allocation2 + $0xf0] sm:$0xff]
      %v892 = vld [vmem:[#allocation2 + $0xf8] sm:$0xff]
      %v909 = vunpack.c.l.b16 %v845
      %v910 = vunpack.c.h.b16 %v845
      %v911 = vunpack.c.l.b16 %v846
      %v912 = vunpack.c.h.b16 %v846
      %v913 = vunpack.c.l.b16 %v847
      %v914 = vunpack.c.h.b16 %v847
      %v915 = vunpack.c.l.b16 %v848
      %v916 = vunpack.c.h.b16 %v848
      %v917 = vunpack.c.l.b16 %v849
      %v918 = vunpack.c.h.b16 %v849
      %v919 = vunpack.c.l.b16 %v850
      %v920 = vunpack.c.h.b16 %v850
      %v921 = vunpack.c.l.b16 %v851
      %v922 = vunpack.c.h.b16 %v851
      %v923 = vunpack.c.l.b16 %v852
      %v924 = vunpack.c.h.b16 %v852
      %v925 = vunpack.c.l.b16 %v853
      %v926 = vunpack.c.h.b16 %v853
      %v927 = vunpack.c.l.b16 %v854
      %v928 = vunpack.c.h.b16 %v854
      %v929 = vunpack.c.l.b16 %v855
      %v930 = vunpack.c.h.b16 %v855
      %v931 = vunpack.c.l.b16 %v856
      %v932 = vunpack.c.h.b16 %v856
      %v933 = vunpack.c.l.b16 %v857
      %v934 = vunpack.c.h.b16 %v857
      %v935 = vunpack.c.l.b16 %v858
      %v936 = vunpack.c.h.b16 %v858
      %v937 = vunpack.c.l.b16 %v859
      %v938 = vunpack.c.h.b16 %v859
      %v939 = vunpack.c.l.b16 %v860
      %v940 = vunpack.c.h.b16 %v860
      %v941 = vpack.c.b16 %v911, %v909
      %v942 = vpack.c.b16 %v912, %v910
      %v943 = vpack.c.b16 %v915, %v913
      %v944 = vpack.c.b16 %v916, %v914
      %v945 = vpack.c.b16 %v919, %v917
      %v946 = vpack.c.b16 %v920, %v918
      %v947 = vpack.c.b16 %v923, %v921
      %v948 = vpack.c.b16 %v924, %v922
      %v949 = vpack.c.b16 %v927, %v925
      %v950 = vpack.c.b16 %v928, %v926
      %v951 = vpack.c.b16 %v931, %v929
      %v952 = vpack.c.b16 %v932, %v930
      %v953 = vpack.c.b16 %v935, %v933
      %v954 = vpack.c.b16 %v936, %v934
      %v955 = vpack.c.b16 %v939, %v937
      %v956 = vpack.c.b16 %v940, %v938
      %v1005 = vunpack.c.l.b16 %v861
      %v1006 = vunpack.c.h.b16 %v861
      %v1007 = vunpack.c.l.b16 %v862
      %v1008 = vunpack.c.h.b16 %v862
      %v1009 = vunpack.c.l.b16 %v863
      %v1010 = vunpack.c.h.b16 %v863
      %v1011 = vunpack.c.l.b16 %v864
      %v1012 = vunpack.c.h.b16 %v864
      %v1013 = vunpack.c.l.b16 %v865
      %v1014 = vunpack.c.h.b16 %v865
      %v1015 = vunpack.c.l.b16 %v866
      %v1016 = vunpack.c.h.b16 %v866
      %v1017 = vunpack.c.l.b16 %v867
      %v1018 = vunpack.c.h.b16 %v867
      %v1019 = vunpack.c.l.b16 %v868
      %v1020 = vunpack.c.h.b16 %v868
      %v1021 = vunpack.c.l.b16 %v869
      %v1022 = vunpack.c.h.b16 %v869
      %v1023 = vunpack.c.l.b16 %v870
      %v1024 = vunpack.c.h.b16 %v870
      %v1025 = vunpack.c.l.b16 %v871
      %v1026 = vunpack.c.h.b16 %v871
      %v1027 = vunpack.c.l.b16 %v872
      %v1028 = vunpack.c.h.b16 %v872
      %v1029 = vunpack.c.l.b16 %v873
      %v1030 = vunpack.c.h.b16 %v873
      %v1031 = vunpack.c.l.b16 %v874
      %v1032 = vunpack.c.h.b16 %v874
      %v1033 = vunpack.c.l.b16 %v875
      %v1034 = vunpack.c.h.b16 %v875
      %v1035 = vunpack.c.l.b16 %v876
      %v1036 = vunpack.c.h.b16 %v876
      %v1037 = vunpack.c.l.b16 %v877
      %v1038 = vunpack.c.h.b16 %v877
      %v1039 = vunpack.c.l.b16 %v878
      %v1040 = vunpack.c.h.b16 %v878
      %v1041 = vunpack.c.l.b16 %v879
      %v1042 = vunpack.c.h.b16 %v879
      %v1043 = vunpack.c.l.b16 %v880
      %v1044 = vunpack.c.h.b16 %v880
      %v1045 = vunpack.c.l.b16 %v881
      %v1046 = vunpack.c.h.b16 %v881
      %v1047 = vunpack.c.l.b16 %v882
      %v1048 = vunpack.c.h.b16 %v882
      %v1049 = vunpack.c.l.b16 %v883
      %v1050 = vunpack.c.h.b16 %v883
      %v1051 = vunpack.c.l.b16 %v884
      %v1052 = vunpack.c.h.b16 %v884
      %v1053 = vunpack.c.l.b16 %v885
      %v1054 = vunpack.c.h.b16 %v885
      %v1055 = vunpack.c.l.b16 %v886
      %v1056 = vunpack.c.h.b16 %v886
      %v1057 = vunpack.c.l.b16 %v887
      %v1058 = vunpack.c.h.b16 %v887
      %v1059 = vunpack.c.l.b16 %v888
      %v1060 = vunpack.c.h.b16 %v888
      %v1061 = vunpack.c.l.b16 %v889
      %v1062 = vunpack.c.h.b16 %v889
      %v1063 = vunpack.c.l.b16 %v890
      %v1064 = vunpack.c.h.b16 %v890
      %v1065 = vunpack.c.l.b16 %v891
      %v1066 = vunpack.c.h.b16 %v891
      %v1067 = vunpack.c.l.b16 %v892
      %v1068 = vunpack.c.h.b16 %v892
      %v1069 = vpack.c.b16 %v1007, %v1005
      %v1070 = vpack.c.b16 %v1008, %v1006
      %v1071 = vpack.c.b16 %v1011, %v1009
      %v1072 = vpack.c.b16 %v1012, %v1010
      %v1073 = vpack.c.b16 %v1015, %v1013
      %v1074 = vpack.c.b16 %v1016, %v1014
      %v1075 = vpack.c.b16 %v1019, %v1017
      %v1076 = vpack.c.b16 %v1020, %v1018
      %v1077 = vpack.c.b16 %v1023, %v1021
      %v1078 = vpack.c.b16 %v1024, %v1022
      %v1079 = vpack.c.b16 %v1027, %v1025
      %v1080 = vpack.c.b16 %v1028, %v1026
      %v1081 = vpack.c.b16 %v1031, %v1029
      %v1082 = vpack.c.b16 %v1032, %v1030
      %v1083 = vpack.c.b16 %v1035, %v1033
      %v1084 = vpack.c.b16 %v1036, %v1034
      %v1085 = vpack.c.b16 %v1039, %v1037
      %v1086 = vpack.c.b16 %v1040, %v1038
      %v1087 = vpack.c.b16 %v1043, %v1041
      %v1088 = vpack.c.b16 %v1044, %v1042
      %v1089 = vpack.c.b16 %v1047, %v1045
      %v1090 = vpack.c.b16 %v1048, %v1046
      %v1091 = vpack.c.b16 %v1051, %v1049
      %v1092 = vpack.c.b16 %v1052, %v1050
      %v1093 = vpack.c.b16 %v1055, %v1053
      %v1094 = vpack.c.b16 %v1056, %v1054
      %v1095 = vpack.c.b16 %v1059, %v1057
      %v1096 = vpack.c.b16 %v1060, %v1058
      %v1097 = vpack.c.b16 %v1063, %v1061
      %v1098 = vpack.c.b16 %v1064, %v1062
      %v1099 = vpack.c.b16 %v1067, %v1065
      %v1100 = vpack.c.b16 %v1068, %v1066
      %1133 = vmatprep.subr.bf16.mxu0 %v1084
      %1134 = vmatpush1.bf16.msra.mxu0 %v1083
      %1135 = vmatprep.subr.bf16.mxu0 %v1082
      %1136 = vmatpush1.bf16.msra.mxu0 %v1081
      %1137 = vmatprep.subr.bf16.mxu0 %v1080
      %1138 = vmatpush1.bf16.msra.mxu0 %v1079
      %1139 = vmatprep.subr.bf16.mxu0 %v1078
      %1140 = vmatpush1.bf16.msra.mxu0 %v1077
      %1141 = vmatprep.subr.bf16.mxu0 %v1076
      %1142 = vmatpush1.bf16.msra.mxu0 %v1075
      %1143 = vmatprep.subr.bf16.mxu0 %v1074
      %1144 = vmatpush1.bf16.msra.mxu0 %v1073
      %1145 = vmatprep.subr.bf16.mxu0 %v1072
      %1146 = vmatpush1.bf16.msra.mxu0 %v1071
      %1147 = vmatprep.subr.bf16.mxu0 %v1070
      %1148 = vmatpush1.bf16.msra.mxu0 %v1069
      %1149 = vmatprep.subr.bf16.mxu0 %v1100
      %1150 = vmatpush2.bf16.msra.mxu0 %v1099
      %1151 = vmatprep.subr.bf16.mxu0 %v1098
      %1152 = vmatpush2.bf16.msra.mxu0 %v1097
      %1153 = vmatprep.subr.bf16.mxu0 %v1096
      %1154 = vmatpush2.bf16.msra.mxu0 %v1095
      %1155 = vmatprep.subr.bf16.mxu0 %v1094
      %1156 = vmatpush2.bf16.msra.mxu0 %v1093
      %1157 = vmatprep.subr.bf16.mxu0 %v1092
      %1158 = vmatpush2.bf16.msra.mxu0 %v1091
      %1159 = vmatprep.subr.bf16.mxu0 %v1090
      %1160 = vmatpush2.bf16.msra.mxu0 %v1089
      %1161 = vmatprep.subr.bf16.mxu0 %v1088
      %1162 = vmatpush2.bf16.msra.mxu0 %v1087
      %1163 = vmatprep.subr.bf16.mxu0 %v1086
      %1164 = vmatpush2.bf16.msra.mxu0 %v1085
      %1165 = vmatprep.mubr.bf16.mxu0 %v942
      %1166 = vmatmul.mubr.bf16.gmra.mxu0 %v941
      %v1167 = vpop.f32.mrf.mxu0
      %v1168 = vadd.f32 0.0, %v1167
      %v1169 = vpop.f32.mrf.mxu0
      %v1170 = vadd.f32 0.0, %v1169
      %v1171 = vpop.f32.mrf.mxu0
      %v1172 = vadd.f32 0.0, %v1171
      %v1173 = vpop.f32.mrf.mxu0
      %v1174 = vadd.f32 0.0, %v1173
      %1175 = vmatprep.mubr.bf16.mxu0 %v944
      %1176 = vmatmul.mubr.bf16.gmra.mxu0 %v943
      %v1177 = vpop.f32.mrf.mxu0
      %v1178 = vadd.f32 0.0, %v1177
      %v1179 = vpop.f32.mrf.mxu0
      %v1180 = vadd.f32 0.0, %v1179
      %v1181 = vpop.f32.mrf.mxu0
      %v1182 = vadd.f32 0.0, %v1181
      %v1183 = vpop.f32.mrf.mxu0
      %v1184 = vadd.f32 0.0, %v1183
      %1185 = vmatprep.mubr.bf16.mxu0 %v946
      %1186 = vmatmul.mubr.bf16.gmra.mxu0 %v945
      %v1187 = vpop.f32.mrf.mxu0
      %v1188 = vadd.f32 0.0, %v1187
      %v1189 = vpop.f32.mrf.mxu0
      %v1190 = vadd.f32 0.0, %v1189
      %v1191 = vpop.f32.mrf.mxu0
      %v1192 = vadd.f32 0.0, %v1191
      %v1193 = vpop.f32.mrf.mxu0
      %v1194 = vadd.f32 0.0, %v1193
      %1195 = vmatprep.mubr.bf16.mxu0 %v948
      %1196 = vmatmul.mubr.bf16.gmra.mxu0 %v947
      %v1197 = vpop.f32.mrf.mxu0
      %v1198 = vadd.f32 0.0, %v1197
      %v1199 = vpop.f32.mrf.mxu0
      %v1200 = vadd.f32 0.0, %v1199
      %v1201 = vpop.f32.mrf.mxu0
      %v1202 = vadd.f32 0.0, %v1201
      %v1203 = vpop.f32.mrf.mxu0
      %v1204 = vadd.f32 0.0, %v1203
      %1205 = vmatprep.mubr.bf16.mxu0 %v950
      %1206 = vmatmul.mubr.bf16.gmra.mxu0 %v949
      %v1207 = vpop.f32.mrf.mxu0
      %v1208 = vadd.f32 0.0, %v1207
      %v1209 = vpop.f32.mrf.mxu0
      %v1210 = vadd.f32 0.0, %v1209
      %v1211 = vpop.f32.mrf.mxu0
      %v1212 = vadd.f32 0.0, %v1211
      %v1213 = vpop.f32.mrf.mxu0
      %v1214 = vadd.f32 0.0, %v1213
      %1215 = vmatprep.mubr.bf16.mxu0 %v952
      %1216 = vmatmul.mubr.bf16.gmra.mxu0 %v951
      %v1217 = vpop.f32.mrf.mxu0
      %v1218 = vadd.f32 0.0, %v1217
      %v1219 = vpop.f32.mrf.mxu0
      %v1220 = vadd.f32 0.0, %v1219
      %v1221 = vpop.f32.mrf.mxu0
      %v1222 = vadd.f32 0.0, %v1221
      %v1223 = vpop.f32.mrf.mxu0
      %v1224 = vadd.f32 0.0, %v1223
      %1225 = vmatprep.mubr.bf16.mxu0 %v954
      %1226 = vmatmul.mubr.bf16.gmra.mxu0 %v953
      %v1227 = vpop.f32.mrf.mxu0
      %v1228 = vadd.f32 0.0, %v1227
      %v1229 = vpop.f32.mrf.mxu0
      %v1230 = vadd.f32 0.0, %v1229
      %v1231 = vpop.f32.mrf.mxu0
      %v1232 = vadd.f32 0.0, %v1231
      %v1233 = vpop.f32.mrf.mxu0
      %v1234 = vadd.f32 0.0, %v1233
      %1235 = vmatprep.mubr.bf16.mxu0 %v956
      %1236 = vmatmul.mubr.bf16.gmra.mxu0 %v955
      %v1237 = vpop.f32.mrf.mxu0
      %v1238 = vadd.f32 0.0, %v1237
      %v1239 = vpop.f32.mrf.mxu0
      %v1240 = vadd.f32 0.0, %v1239
      %v1241 = vpop.f32.mrf.mxu0
      %v1242 = vadd.f32 0.0, %v1241
      %v1243 = vpop.f32.mrf.mxu0
      %v1244 = vadd.f32 0.0, %v1243
      %1245 = vdwg.mxu0
      %vm1246 = vcmask 556032
      %v1247 = vsel %vm1246, %v1170, 0.0
      %v1248 = vadd.f32 %v1168, %v1247
      %1249 = vadd.xlane.f32.xlu0 %v1248
      %v1250 = vpop.xlane.xlu0 %1249
      %v1251 = vsel %vm1246, %v1174, 0.0
      %v1252 = vadd.f32 %v1172, %v1251
      %1253 = vadd.xlane.f32.xlu0 %v1252
      %v1254 = vpop.xlane.xlu0 %1253
      %v1255 = vsel %vm1246, %v1180, 0.0
      %v1256 = vadd.f32 %v1178, %v1255
      %1257 = vadd.xlane.f32.xlu0 %v1256
      %v1258 = vpop.xlane.xlu0 %1257
      %v1259 = vsel %vm1246, %v1184, 0.0
      %v1260 = vadd.f32 %v1182, %v1259
      %1261 = vadd.xlane.f32.xlu0 %v1260
      %v1262 = vpop.xlane.xlu0 %1261
      %v1263 = vsel %vm1246, %v1190, 0.0
      %v1264 = vadd.f32 %v1188, %v1263
      %1265 = vadd.xlane.f32.xlu0 %v1264
      %v1266 = vpop.xlane.xlu0 %1265
      %v1267 = vsel %vm1246, %v1194, 0.0
      %v1268 = vadd.f32 %v1192, %v1267
      %1269 = vadd.xlane.f32.xlu0 %v1268
      %v1270 = vpop.xlane.xlu0 %1269
      %v1271 = vsel %vm1246, %v1200, 0.0
      %v1272 = vadd.f32 %v1198, %v1271
      %1273 = vadd.xlane.f32.xlu0 %v1272
      %v1274 = vpop.xlane.xlu0 %1273
      %v1275 = vsel %vm1246, %v1204, 0.0
      %v1276 = vadd.f32 %v1202, %v1275
      %1277 = vadd.xlane.f32.xlu0 %v1276
      %v1278 = vpop.xlane.xlu0 %1277
      %v1279 = vsel %vm1246, %v1210, 0.0
      %v1280 = vadd.f32 %v1208, %v1279
      %1281 = vadd.xlane.f32.xlu0 %v1280
      %v1282 = vpop.xlane.xlu0 %1281
      %v1283 = vsel %vm1246, %v1214, 0.0
      %v1284 = vadd.f32 %v1212, %v1283
      %1285 = vadd.xlane.f32.xlu0 %v1284
      %v1286 = vpop.xlane.xlu0 %1285
      %v1287 = vsel %vm1246, %v1220, 0.0
      %v1288 = vadd.f32 %v1218, %v1287
      %1289 = vadd.xlane.f32.xlu0 %v1288
      %v1290 = vpop.xlane.xlu0 %1289
      %v1291 = vsel %vm1246, %v1224, 0.0
      %v1292 = vadd.f32 %v1222, %v1291
      %1293 = vadd.xlane.f32.xlu0 %v1292
      %v1294 = vpop.xlane.xlu0 %1293
      %v1295 = vsel %vm1246, %v1230, 0.0
      %v1296 = vadd.f32 %v1228, %v1295
      %1297 = vadd.xlane.f32.xlu0 %v1296
      %v1298 = vpop.xlane.xlu0 %1297
      %v1299 = vsel %vm1246, %v1234, 0.0
      %v1300 = vadd.f32 %v1232, %v1299
      %1301 = vadd.xlane.f32.xlu0 %v1300
      %v1302 = vpop.xlane.xlu0 %1301
      %v1303 = vsel %vm1246, %v1240, 0.0
      %v1304 = vadd.f32 %v1238, %v1303
      %1305 = vadd.xlane.f32.xlu0 %v1304
      %v1306 = vpop.xlane.xlu0 %1305
      %v1307 = vsel %vm1246, %v1244, 0.0
      %v1308 = vadd.f32 %v1242, %v1307
      %1309 = vadd.xlane.f32.xlu0 %v1308
      %v1310 = vpop.xlane.xlu0 %1309
      %v1311 = vmul.f32 %v1250, 0.0051020407
      %v1312 = vmul.f32 %v1254, 0.0051020407
      %v1313 = vmul.f32 %v1258, 0.0051020407
      %v1314 = vmul.f32 %v1262, 0.0051020407
      %v1315 = vmul.f32 %v1266, 0.0051020407
      %v1316 = vmul.f32 %v1270, 0.0051020407
      %v1317 = vmul.f32 %v1274, 0.0051020407
      %v1318 = vmul.f32 %v1278, 0.0051020407
      %v1319 = vmul.f32 %v1282, 0.0051020407
      %v1320 = vmul.f32 %v1286, 0.0051020407
      %v1321 = vmul.f32 %v1290, 0.0051020407
      %v1322 = vmul.f32 %v1294, 0.0051020407
      %v1323 = vmul.f32 %v1298, 0.0051020407
      %v1324 = vmul.f32 %v1302, 0.0051020407
      %v1325 = vmul.f32 %v1306, 0.0051020407
      %v1326 = vmul.f32 %v1310, 0.0051020407
      %v1327 = vsub.f32 %v1168, %v1311
      %v1328 = vsub.f32 %v1170, %v1311
      %v1329 = vsub.f32 %v1172, %v1312
      %v1330 = vsub.f32 %v1174, %v1312
      %v1331 = vsub.f32 %v1178, %v1313
      %v1332 = vsub.f32 %v1180, %v1313
      %v1333 = vsub.f32 %v1182, %v1314
      %v1334 = vsub.f32 %v1184, %v1314
      %v1335 = vsub.f32 %v1188, %v1315
      %v1336 = vsub.f32 %v1190, %v1315
      %v1337 = vsub.f32 %v1192, %v1316
      %v1338 = vsub.f32 %v1194, %v1316
      %v1339 = vsub.f32 %v1198, %v1317
      %v1340 = vsub.f32 %v1200, %v1317
      %v1341 = vsub.f32 %v1202, %v1318
      %v1342 = vsub.f32 %v1204, %v1318
      %v1343 = vsub.f32 %v1208, %v1319
      %v1344 = vsub.f32 %v1210, %v1319
      %v1345 = vsub.f32 %v1212, %v1320
      %v1346 = vsub.f32 %v1214, %v1320
      %v1347 = vsub.f32 %v1218, %v1321
      %v1348 = vsub.f32 %v1220, %v1321
      %v1349 = vsub.f32 %v1222, %v1322
      %v1350 = vsub.f32 %v1224, %v1322
      %v1351 = vsub.f32 %v1228, %v1323
      %v1352 = vsub.f32 %v1230, %v1323
      %v1353 = vsub.f32 %v1232, %v1324
      %v1354 = vsub.f32 %v1234, %v1324
      %v1355 = vsub.f32 %v1238, %v1325
      %v1356 = vsub.f32 %v1240, %v1325
      %v1357 = vsub.f32 %v1242, %v1326
      %v1358 = vsub.f32 %v1244, %v1326
      %v1359 = vmul.f32 %v1327, %v1327
      %v1360 = vmul.f32 %v1328, %v1328
      %v1361 = vmul.f32 %v1329, %v1329
      %v1362 = vmul.f32 %v1330, %v1330
      %v1363 = vmul.f32 %v1331, %v1331
      %v1364 = vmul.f32 %v1332, %v1332
      %v1365 = vmul.f32 %v1333, %v1333
      %v1366 = vmul.f32 %v1334, %v1334
      %v1367 = vmul.f32 %v1335, %v1335
      %v1368 = vmul.f32 %v1336, %v1336
      %v1369 = vmul.f32 %v1337, %v1337
      %v1370 = vmul.f32 %v1338, %v1338
      %v1371 = vmul.f32 %v1339, %v1339
      %v1372 = vmul.f32 %v1340, %v1340
      %v1373 = vmul.f32 %v1341, %v1341
      %v1374 = vmul.f32 %v1342, %v1342
      %v1375 = vmul.f32 %v1343, %v1343
      %v1376 = vmul.f32 %v1344, %v1344
      %v1377 = vmul.f32 %v1345, %v1345
      %v1378 = vmul.f32 %v1346, %v1346
      %v1379 = vmul.f32 %v1347, %v1347
      %v1380 = vmul.f32 %v1348, %v1348
      %v1381 = vmul.f32 %v1349, %v1349
      %v1382 = vmul.f32 %v1350, %v1350
      %v1383 = vmul.f32 %v1351, %v1351
      %v1384 = vmul.f32 %v1352, %v1352
      %v1385 = vmul.f32 %v1353, %v1353
      %v1386 = vmul.f32 %v1354, %v1354
      %v1387 = vmul.f32 %v1355, %v1355
      %v1388 = vmul.f32 %v1356, %v1356
      %v1389 = vmul.f32 %v1357, %v1357
      %v1390 = vmul.f32 %v1358, %v1358
      %v1391 = vsel %vm1246, %v1360, 0.0
      %v1392 = vadd.f32 %v1359, %v1391
      %1393 = vadd.xlane.f32.xlu0 %v1392
      %v1394 = vpop.xlane.xlu0 %1393
      %v1395 = vsel %vm1246, %v1362, 0.0
      %v1396 = vadd.f32 %v1361, %v1395
      %1397 = vadd.xlane.f32.xlu0 %v1396
      %v1398 = vpop.xlane.xlu0 %1397
      %v1399 = vsel %vm1246, %v1364, 0.0
      %v1400 = vadd.f32 %v1363, %v1399
      %1401 = vadd.xlane.f32.xlu0 %v1400
      %v1402 = vpop.xlane.xlu0 %1401
      %v1403 = vsel %vm1246, %v1366, 0.0
      %v1404 = vadd.f32 %v1365, %v1403
      %1405 = vadd.xlane.f32.xlu0 %v1404
      %v1406 = vpop.xlane.xlu0 %1405
      %v1407 = vsel %vm1246, %v1368, 0.0
      %v1408 = vadd.f32 %v1367, %v1407
      %1409 = vadd.xlane.f32.xlu0 %v1408
      %v1410 = vpop.xlane.xlu0 %1409
      %v1411 = vsel %vm1246, %v1370, 0.0
      %v1412 = vadd.f32 %v1369, %v1411
      %1413 = vadd.xlane.f32.xlu0 %v1412
      %v1414 = vpop.xlane.xlu0 %1413
      %v1415 = vsel %vm1246, %v1372, 0.0
      %v1416 = vadd.f32 %v1371, %v1415
      %1417 = vadd.xlane.f32.xlu0 %v1416
      %v1418 = vpop.xlane.xlu0 %1417
      %v1419 = vsel %vm1246, %v1374, 0.0
      %v1420 = vadd.f32 %v1373, %v1419
      %1421 = vadd.xlane.f32.xlu0 %v1420
      %v1422 = vpop.xlane.xlu0 %1421
      %v1423 = vsel %vm1246, %v1376, 0.0
      %v1424 = vadd.f32 %v1375, %v1423
      %1425 = vadd.xlane.f32.xlu0 %v1424
      %v1426 = vpop.xlane.xlu0 %1425
      %v1427 = vsel %vm1246, %v1378, 0.0
      %v1428 = vadd.f32 %v1377, %v1427
      %1429 = vadd.xlane.f32.xlu0 %v1428
      %v1430 = vpop.xlane.xlu0 %1429
      %v1431 = vsel %vm1246, %v1380, 0.0
      %v1432 = vadd.f32 %v1379, %v1431
      %1433 = vadd.xlane.f32.xlu0 %v1432
      %v1434 = vpop.xlane.xlu0 %1433
      %v1435 = vsel %vm1246, %v1382, 0.0
      %v1436 = vadd.f32 %v1381, %v1435
      %1437 = vadd.xlane.f32.xlu0 %v1436
      %v1438 = vpop.xlane.xlu0 %1437
      %v1439 = vsel %vm1246, %v1384, 0.0
      %v1440 = vadd.f32 %v1383, %v1439
      %1441 = vadd.xlane.f32.xlu0 %v1440
      %v1442 = vpop.xlane.xlu0 %1441
      %v1443 = vsel %vm1246, %v1386, 0.0
      %v1444 = vadd.f32 %v1385, %v1443
      %1445 = vadd.xlane.f32.xlu0 %v1444
      %v1446 = vpop.xlane.xlu0 %1445
      %v1447 = vsel %vm1246, %v1388, 0.0
      %v1448 = vadd.f32 %v1387, %v1447
      %1449 = vadd.xlane.f32.xlu0 %v1448
      %v1450 = vpop.xlane.xlu0 %1449
      %v1451 = vsel %vm1246, %v1390, 0.0
      %v1452 = vadd.f32 %v1389, %v1451
      %1453 = vadd.xlane.f32.xlu0 %v1452
      %v1454 = vpop.xlane.xlu0 %1453
      %v1455 = vmul.f32 %v1394, 0.0051020407
      %v1456 = vmul.f32 %v1398, 0.0051020407
      %v1457 = vmul.f32 %v1402, 0.0051020407
      %v1458 = vmul.f32 %v1406, 0.0051020407
      %v1459 = vmul.f32 %v1410, 0.0051020407
      %v1460 = vmul.f32 %v1414, 0.0051020407
      %v1461 = vmul.f32 %v1418, 0.0051020407
      %v1462 = vmul.f32 %v1422, 0.0051020407
      %v1463 = vmul.f32 %v1426, 0.0051020407
      %v1464 = vmul.f32 %v1430, 0.0051020407
      %v1465 = vmul.f32 %v1434, 0.0051020407
      %v1466 = vmul.f32 %v1438, 0.0051020407
      %v1467 = vmul.f32 %v1442, 0.0051020407
      %v1468 = vmul.f32 %v1446, 0.0051020407
      %v1469 = vmul.f32 %v1450, 0.0051020407
      %v1470 = vmul.f32 %v1454, 0.0051020407
      %s1471 = smul.u32 %s18, 128
      %s1472 = scalar_lea.vmem %s2, %s1471
      %v1473 = vld [vmem:[%s1472] sm:$0xff]
      %v1474 = vld [vmem:[%s1472 + $0x8] sm:$0xff]
      %v1475 = vld [vmem:[%s1472 + $0x10] sm:$0xff]
      %v1476 = vld [vmem:[%s1472 + $0x18] sm:$0xff]
      %v1477 = vld [vmem:[%s1472 + $0x20] sm:$0xff]
      %v1478 = vld [vmem:[%s1472 + $0x28] sm:$0xff]
      %v1479 = vld [vmem:[%s1472 + $0x30] sm:$0xff]
      %v1480 = vld [vmem:[%s1472 + $0x38] sm:$0xff]
      %v1481 = vld [vmem:[%s1472 + $0x40] sm:$0xff]
      %v1482 = vld [vmem:[%s1472 + $0x48] sm:$0xff]
      %v1483 = vld [vmem:[%s1472 + $0x50] sm:$0xff]
      %v1484 = vld [vmem:[%s1472 + $0x58] sm:$0xff]
      %v1485 = vld [vmem:[%s1472 + $0x60] sm:$0xff]
      %v1486 = vld [vmem:[%s1472 + $0x68] sm:$0xff]
      %v1487 = vld [vmem:[%s1472 + $0x70] sm:$0xff]
      %v1488 = vld [vmem:[%s1472 + $0x78] sm:$0xff]
      %s1489 = scalar_lea.vmem %s3, %s1471
      %v1490 = vld [vmem:[%s1489] sm:$0xff]
      %v1491 = vld [vmem:[%s1489 + $0x8] sm:$0xff]
      %v1492 = vld [vmem:[%s1489 + $0x10] sm:$0xff]
      %v1493 = vld [vmem:[%s1489 + $0x18] sm:$0xff]
      %v1494 = vld [vmem:[%s1489 + $0x20] sm:$0xff]
      %v1495 = vld [vmem:[%s1489 + $0x28] sm:$0xff]
      %v1496 = vld [vmem:[%s1489 + $0x30] sm:$0xff]
      %v1497 = vld [vmem:[%s1489 + $0x38] sm:$0xff]
      %v1498 = vld [vmem:[%s1489 + $0x40] sm:$0xff]
      %v1499 = vld [vmem:[%s1489 + $0x48] sm:$0xff]
      %v1500 = vld [vmem:[%s1489 + $0x50] sm:$0xff]
      %v1501 = vld [vmem:[%s1489 + $0x58] sm:$0xff]
      %v1502 = vld [vmem:[%s1489 + $0x60] sm:$0xff]
      %v1503 = vld [vmem:[%s1489 + $0x68] sm:$0xff]
      %v1504 = vld [vmem:[%s1489 + $0x70] sm:$0xff]
      %v1505 = vld [vmem:[%s1489 + $0x78] sm:$0xff]
      %v1506 = vadd.f32 %v1455, 1e-05
      %v1507 = vadd.f32 %v1456, 1e-05
      %v1508 = vadd.f32 %v1457, 1e-05
      %v1509 = vadd.f32 %v1458, 1e-05
      %v1510 = vadd.f32 %v1459, 1e-05
      %v1511 = vadd.f32 %v1460, 1e-05
      %v1512 = vadd.f32 %v1461, 1e-05
      %v1513 = vadd.f32 %v1462, 1e-05
      %v1514 = vadd.f32 %v1463, 1e-05
      %v1515 = vadd.f32 %v1464, 1e-05
      %v1516 = vadd.f32 %v1465, 1e-05
      %v1517 = vadd.f32 %v1466, 1e-05
      %v1518 = vadd.f32 %v1467, 1e-05
      %v1519 = vadd.f32 %v1468, 1e-05
      %v1520 = vadd.f32 %v1469, 1e-05
      %v1521 = vadd.f32 %v1470, 1e-05
      %v1522 = vrsqrt.pop %v1506
      %v1523 = vrsqrt.pop %v1507
      %v1524 = vrsqrt.pop %v1508
      %v1525 = vrsqrt.pop %v1509
      %v1526 = vrsqrt.pop %v1510
      %v1527 = vrsqrt.pop %v1511
      %v1528 = vrsqrt.pop %v1512
      %v1529 = vrsqrt.pop %v1513
      %v1530 = vrsqrt.pop %v1514
      %v1531 = vrsqrt.pop %v1515
      %v1532 = vrsqrt.pop %v1516
      %v1533 = vrsqrt.pop %v1517
      %v1534 = vrsqrt.pop %v1518
      %v1535 = vrsqrt.pop %v1519
      %v1536 = vrsqrt.pop %v1520
      %v1537 = vrsqrt.pop %v1521
      %v1538 = vmul.f32 %v1522, %v1473
      %v1539 = vmul.f32 %v1523, %v1474
      %v1540 = vmul.f32 %v1524, %v1475
      %v1541 = vmul.f32 %v1525, %v1476
      %v1542 = vmul.f32 %v1526, %v1477
      %v1543 = vmul.f32 %v1527, %v1478
      %v1544 = vmul.f32 %v1528, %v1479
      %v1545 = vmul.f32 %v1529, %v1480
      %v1546 = vmul.f32 %v1530, %v1481
      %v1547 = vmul.f32 %v1531, %v1482
      %v1548 = vmul.f32 %v1532, %v1483
      %v1549 = vmul.f32 %v1533, %v1484
      %v1550 = vmul.f32 %v1534, %v1485
      %v1551 = vmul.f32 %v1535, %v1486
      %v1552 = vmul.f32 %v1536, %v1487
      %v1553 = vmul.f32 %v1537, %v1488
      %1555 = vset.pattern.permute.xlu0 0
      %1556 = vperm.xlu0 %1555, %v1538
      %v1557 = vpop.permute.xlu0 %1556
      %1560 = vset.pattern.permute.xlu0 0
      %1561 = vperm.xlu0 %1560, %v1539
      %v1562 = vpop.permute.xlu0 %1561
      %1565 = vset.pattern.permute.xlu0 0
      %1566 = vperm.xlu0 %1565, %v1540
      %v1567 = vpop.permute.xlu0 %1566
      %1570 = vset.pattern.permute.xlu0 0
      %1571 = vperm.xlu0 %1570, %v1541
      %v1572 = vpop.permute.xlu0 %1571
      %1575 = vset.pattern.permute.xlu0 0
      %1576 = vperm.xlu0 %1575, %v1542
      %v1577 = vpop.permute.xlu0 %1576
      %1580 = vset.pattern.permute.xlu0 0
      %1581 = vperm.xlu0 %1580, %v1543
      %v1582 = vpop.permute.xlu0 %1581
      %1585 = vset.pattern.permute.xlu0 0
      %1586 = vperm.xlu0 %1585, %v1544
      %v1587 = vpop.permute.xlu0 %1586
      %1590 = vset.pattern.permute.xlu0 0
      %1591 = vperm.xlu0 %1590, %v1545
      %v1592 = vpop.permute.xlu0 %1591
      %1595 = vset.pattern.permute.xlu0 0
      %1596 = vperm.xlu0 %1595, %v1546
      %v1597 = vpop.permute.xlu0 %1596
      %1600 = vset.pattern.permute.xlu0 0
      %1601 = vperm.xlu0 %1600, %v1547
      %v1602 = vpop.permute.xlu0 %1601
      %1605 = vset.pattern.permute.xlu0 0
      %1606 = vperm.xlu0 %1605, %v1548
      %v1607 = vpop.permute.xlu0 %1606
      %1610 = vset.pattern.permute.xlu0 0
      %1611 = vperm.xlu0 %1610, %v1549
      %v1612 = vpop.permute.xlu0 %1611
      %1615 = vset.pattern.permute.xlu0 0
      %1616 = vperm.xlu0 %1615, %v1550
      %v1617 = vpop.permute.xlu0 %1616
      %1620 = vset.pattern.permute.xlu0 0
      %1621 = vperm.xlu0 %1620, %v1551
      %v1622 = vpop.permute.xlu0 %1621
      %1625 = vset.pattern.permute.xlu0 0
      %1626 = vperm.xlu0 %1625, %v1552
      %v1627 = vpop.permute.xlu0 %1626
      %1630 = vset.pattern.permute.xlu0 0
      %1631 = vperm.xlu0 %1630, %v1553
      %v1632 = vpop.permute.xlu0 %1631
      %v1634 = vmul.f32 %v1327, %v1557
      %v1635 = vmul.f32 %v1328, %v1557
      %v1636 = vmul.f32 %v1329, %v1562
      %v1637 = vmul.f32 %v1330, %v1562
      %v1638 = vmul.f32 %v1331, %v1567
      %v1639 = vmul.f32 %v1332, %v1567
      %v1640 = vmul.f32 %v1333, %v1572
      %v1641 = vmul.f32 %v1334, %v1572
      %v1642 = vmul.f32 %v1335, %v1577
      %v1643 = vmul.f32 %v1336, %v1577
      %v1644 = vmul.f32 %v1337, %v1582
      %v1645 = vmul.f32 %v1338, %v1582
      %v1646 = vmul.f32 %v1339, %v1587
      %v1647 = vmul.f32 %v1340, %v1587
      %v1648 = vmul.f32 %v1341, %v1592
      %v1649 = vmul.f32 %v1342, %v1592
      %v1650 = vmul.f32 %v1343, %v1597
      %v1651 = vmul.f32 %v1344, %v1597
      %v1652 = vmul.f32 %v1345, %v1602
      %v1653 = vmul.f32 %v1346, %v1602
      %v1654 = vmul.f32 %v1347, %v1607
      %v1655 = vmul.f32 %v1348, %v1607
      %v1656 = vmul.f32 %v1349, %v1612
      %v1657 = vmul.f32 %v1350, %v1612
      %v1658 = vmul.f32 %v1351, %v1617
      %v1659 = vmul.f32 %v1352, %v1617
      %v1660 = vmul.f32 %v1353, %v1622
      %v1661 = vmul.f32 %v1354, %v1622
      %v1662 = vmul.f32 %v1355, %v1627
      %v1663 = vmul.f32 %v1356, %v1627
      %v1664 = vmul.f32 %v1357, %v1632
      %v1665 = vmul.f32 %v1358, %v1632
      %1667 = vset.pattern.permute.xlu0 0
      %1668 = vperm.xlu0 %1667, %v1490
      %v1669 = vpop.permute.xlu0 %1668
      %1672 = vset.pattern.permute.xlu0 0
      %1673 = vperm.xlu0 %1672, %v1491
      %v1674 = vpop.permute.xlu0 %1673
      %1677 = vset.pattern.permute.xlu0 0
      %1678 = vperm.xlu0 %1677, %v1492
      %v1679 = vpop.permute.xlu0 %1678
      %1682 = vset.pattern.permute.xlu0 0
      %1683 = vperm.xlu0 %1682, %v1493
      %v1684 = vpop.permute.xlu0 %1683
      %1687 = vset.pattern.permute.xlu0 0
      %1688 = vperm.xlu0 %1687, %v1494
      %v1689 = vpop.permute.xlu0 %1688
      %1692 = vset.pattern.permute.xlu0 0
      %1693 = vperm.xlu0 %1692, %v1495
      %v1694 = vpop.permute.xlu0 %1693
      %1697 = vset.pattern.permute.xlu0 0
      %1698 = vperm.xlu0 %1697, %v1496
      %v1699 = vpop.permute.xlu0 %1698
      %1702 = vset.pattern.permute.xlu0 0
      %1703 = vperm.xlu0 %1702, %v1497
      %v1704 = vpop.permute.xlu0 %1703
      %1707 = vset.pattern.permute.xlu0 0
      %1708 = vperm.xlu0 %1707, %v1498
      %v1709 = vpop.permute.xlu0 %1708
      %1712 = vset.pattern.permute.xlu0 0
      %1713 = vperm.xlu0 %1712, %v1499
      %v1714 = vpop.permute.xlu0 %1713
      %1717 = vset.pattern.permute.xlu0 0
      %1718 = vperm.xlu0 %1717, %v1500
      %v1719 = vpop.permute.xlu0 %1718
      %1722 = vset.pattern.permute.xlu0 0
      %1723 = vperm.xlu0 %1722, %v1501
      %v1724 = vpop.permute.xlu0 %1723
      %1727 = vset.pattern.permute.xlu0 0
      %1728 = vperm.xlu0 %1727, %v1502
      %v1729 = vpop.permute.xlu0 %1728
      %1732 = vset.pattern.permute.xlu0 0
      %1733 = vperm.xlu0 %1732, %v1503
      %v1734 = vpop.permute.xlu0 %1733
      %1737 = vset.pattern.permute.xlu0 0
      %1738 = vperm.xlu0 %1737, %v1504
      %v1739 = vpop.permute.xlu0 %1738
      %1742 = vset.pattern.permute.xlu0 0
      %1743 = vperm.xlu0 %1742, %v1505
      %v1744 = vpop.permute.xlu0 %1743
      %v1746 = vadd.f32 %v1634, %v1669
      %v1747 = vadd.f32 %v1635, %v1669
      %v1748 = vadd.f32 %v1636, %v1674
      %v1749 = vadd.f32 %v1637, %v1674
      %v1750 = vadd.f32 %v1638, %v1679
      %v1751 = vadd.f32 %v1639, %v1679
      %v1752 = vadd.f32 %v1640, %v1684
      %v1753 = vadd.f32 %v1641, %v1684
      %v1754 = vadd.f32 %v1642, %v1689
      %v1755 = vadd.f32 %v1643, %v1689
      %v1756 = vadd.f32 %v1644, %v1694
      %v1757 = vadd.f32 %v1645, %v1694
      %v1758 = vadd.f32 %v1646, %v1699
      %v1759 = vadd.f32 %v1647, %v1699
      %v1760 = vadd.f32 %v1648, %v1704
      %v1761 = vadd.f32 %v1649, %v1704
      %v1762 = vadd.f32 %v1650, %v1709
      %v1763 = vadd.f32 %v1651, %v1709
      %v1764 = vadd.f32 %v1652, %v1714
      %v1765 = vadd.f32 %v1653, %v1714
      %v1766 = vadd.f32 %v1654, %v1719
      %v1767 = vadd.f32 %v1655, %v1719
      %v1768 = vadd.f32 %v1656, %v1724
      %v1769 = vadd.f32 %v1657, %v1724
      %v1770 = vadd.f32 %v1658, %v1729
      %v1771 = vadd.f32 %v1659, %v1729
      %v1772 = vadd.f32 %v1660, %v1734
      %v1773 = vadd.f32 %v1661, %v1734
      %v1774 = vadd.f32 %v1662, %v1739
      %v1775 = vadd.f32 %v1663, %v1739
      %v1776 = vadd.f32 %v1664, %v1744
      %v1777 = vadd.f32 %v1665, %v1744
      %v1778 = vld [vmem:[%s292] sm:$0xff]
      %v1779 = vld [vmem:[%s292 + $0x8] sm:$0xff]
      %v1780 = vld [vmem:[%s292 + $0x10] sm:$0xff]
      %v1781 = vld [vmem:[%s292 + $0x18] sm:$0xff]
      %v1782 = vld [vmem:[%s292 + $0x20] sm:$0xff]
      %v1783 = vld [vmem:[%s292 + $0x28] sm:$0xff]
      %v1784 = vld [vmem:[%s292 + $0x30] sm:$0xff]
      %v1785 = vld [vmem:[%s292 + $0x38] sm:$0xff]
      %v1786 = vld [vmem:[%s292 + $0x40] sm:$0xff]
      %v1787 = vld [vmem:[%s292 + $0x48] sm:$0xff]
      %v1788 = vld [vmem:[%s292 + $0x50] sm:$0xff]
      %v1789 = vld [vmem:[%s292 + $0x58] sm:$0xff]
      %v1790 = vld [vmem:[%s292 + $0x60] sm:$0xff]
      %v1791 = vld [vmem:[%s292 + $0x68] sm:$0xff]
      %v1792 = vld [vmem:[%s292 + $0x70] sm:$0xff]
      %v1793 = vld [vmem:[%s292 + $0x78] sm:$0xff]
      %v1794 = vld [vmem:[%s292 + $0x80] sm:$0xff]
      %v1795 = vld [vmem:[%s292 + $0x88] sm:$0xff]
      %v1796 = vld [vmem:[%s292 + $0x90] sm:$0xff]
      %v1797 = vld [vmem:[%s292 + $0x98] sm:$0xff]
      %v1798 = vld [vmem:[%s292 + $0xa0] sm:$0xff]
      %v1799 = vld [vmem:[%s292 + $0xa8] sm:$0xff]
      %v1800 = vld [vmem:[%s292 + $0xb0] sm:$0xff]
      %v1801 = vld [vmem:[%s292 + $0xb8] sm:$0xff]
      %v1802 = vld [vmem:[%s292 + $0xc0] sm:$0xff]
      %v1803 = vld [vmem:[%s292 + $0xc8] sm:$0xff]
      %v1804 = vld [vmem:[%s292 + $0xd0] sm:$0xff]
      %v1805 = vld [vmem:[%s292 + $0xd8] sm:$0xff]
      %v1806 = vld [vmem:[%s292 + $0xe0] sm:$0xff]
      %v1807 = vld [vmem:[%s292 + $0xe8] sm:$0xff]
      %v1808 = vld [vmem:[%s292 + $0xf0] sm:$0xff]
      %v1809 = vld [vmem:[%s292 + $0xf8] sm:$0xff]
      %v1810 = vadd.f32 %v1778, %v1746
      %v1811 = vadd.f32 %v1779, %v1747
      %v1812 = vadd.f32 %v1780, %v1748
      %v1813 = vadd.f32 %v1781, %v1749
      %v1814 = vadd.f32 %v1782, %v1750
      %v1815 = vadd.f32 %v1783, %v1751
      %v1816 = vadd.f32 %v1784, %v1752
      %v1817 = vadd.f32 %v1785, %v1753
      %v1818 = vadd.f32 %v1786, %v1754
      %v1819 = vadd.f32 %v1787, %v1755
      %v1820 = vadd.f32 %v1788, %v1756
      %v1821 = vadd.f32 %v1789, %v1757
      %v1822 = vadd.f32 %v1790, %v1758
      %v1823 = vadd.f32 %v1791, %v1759
      %v1824 = vadd.f32 %v1792, %v1760
      %v1825 = vadd.f32 %v1793, %v1761
      %v1826 = vadd.f32 %v1794, %v1762
      %v1827 = vadd.f32 %v1795, %v1763
      %v1828 = vadd.f32 %v1796, %v1764
      %v1829 = vadd.f32 %v1797, %v1765
      %v1830 = vadd.f32 %v1798, %v1766
      %v1831 = vadd.f32 %v1799, %v1767
      %v1832 = vadd.f32 %v1800, %v1768
      %v1833 = vadd.f32 %v1801, %v1769
      %v1834 = vadd.f32 %v1802, %v1770
      %v1835 = vadd.f32 %v1803, %v1771
      %v1836 = vadd.f32 %v1804, %v1772
      %v1837 = vadd.f32 %v1805, %v1773
      %v1838 = vadd.f32 %v1806, %v1774
      %v1839 = vadd.f32 %v1807, %v1775
      %v1840 = vadd.f32 %v1808, %v1776
      %v1841 = vadd.f32 %v1809, %v1777
      %v1842 = vmax.f32 %v1810, 0.0
      %v1843 = vmax.f32 %v1811, 0.0
      %v1844 = vmax.f32 %v1812, 0.0
      %v1845 = vmax.f32 %v1813, 0.0
      %v1846 = vmax.f32 %v1814, 0.0
      %v1847 = vmax.f32 %v1815, 0.0
      %v1848 = vmax.f32 %v1816, 0.0
      %v1849 = vmax.f32 %v1817, 0.0
      %v1850 = vmax.f32 %v1818, 0.0
      %v1851 = vmax.f32 %v1819, 0.0
      %v1852 = vmax.f32 %v1820, 0.0
      %v1853 = vmax.f32 %v1821, 0.0
      %v1854 = vmax.f32 %v1822, 0.0
      %v1855 = vmax.f32 %v1823, 0.0
      %v1856 = vmax.f32 %v1824, 0.0
      %v1857 = vmax.f32 %v1825, 0.0
      %v1858 = vmax.f32 %v1826, 0.0
      %v1859 = vmax.f32 %v1827, 0.0
      %v1860 = vmax.f32 %v1828, 0.0
      %v1861 = vmax.f32 %v1829, 0.0
      %v1862 = vmax.f32 %v1830, 0.0
      %v1863 = vmax.f32 %v1831, 0.0
      %v1864 = vmax.f32 %v1832, 0.0
      %v1865 = vmax.f32 %v1833, 0.0
      %v1866 = vmax.f32 %v1834, 0.0
      %v1867 = vmax.f32 %v1835, 0.0
      %v1868 = vmax.f32 %v1836, 0.0
      %v1869 = vmax.f32 %v1837, 0.0
      %v1870 = vmax.f32 %v1838, 0.0
      %v1871 = vmax.f32 %v1839, 0.0
      %v1872 = vmax.f32 %v1840, 0.0
      %v1873 = vmax.f32 %v1841, 0.0
      %v1874 = vpack.c.bf16 %v1844, %v1842
      %v1875 = vpack.c.bf16 %v1845, %v1843
      %v1876 = vpack.c.bf16 %v1848, %v1846
      %v1877 = vpack.c.bf16 %v1849, %v1847
      %v1878 = vpack.c.bf16 %v1852, %v1850
      %v1879 = vpack.c.bf16 %v1853, %v1851
      %v1880 = vpack.c.bf16 %v1856, %v1854
      %v1881 = vpack.c.bf16 %v1857, %v1855
      %v1882 = vpack.c.bf16 %v1860, %v1858
      %v1883 = vpack.c.bf16 %v1861, %v1859
      %v1884 = vpack.c.bf16 %v1864, %v1862
      %v1885 = vpack.c.bf16 %v1865, %v1863
      %v1886 = vpack.c.bf16 %v1868, %v1866
      %v1887 = vpack.c.bf16 %v1869, %v1867
      %v1888 = vpack.c.bf16 %v1872, %v1870
      %v1889 = vpack.c.bf16 %v1873, %v1871
      %v1906 = vunpack.c.l.b16 %v1874
      %v1907 = vunpack.c.l.b16 %v1875
      %v1908 = vunpack.c.h.b16 %v1874
      %v1909 = vunpack.c.h.b16 %v1875
      %v1910 = vunpack.c.l.b16 %v1876
      %v1911 = vunpack.c.l.b16 %v1877
      %v1912 = vunpack.c.h.b16 %v1876
      %v1913 = vunpack.c.h.b16 %v1877
      %v1914 = vunpack.c.l.b16 %v1878
      %v1915 = vunpack.c.l.b16 %v1879
      %v1916 = vunpack.c.h.b16 %v1878
      %v1917 = vunpack.c.h.b16 %v1879
      %v1918 = vunpack.c.l.b16 %v1880
      %v1919 = vunpack.c.l.b16 %v1881
      %v1920 = vunpack.c.h.b16 %v1880
      %v1921 = vunpack.c.h.b16 %v1881
      %v1922 = vunpack.c.l.b16 %v1882
      %v1923 = vunpack.c.l.b16 %v1883
      %v1924 = vunpack.c.h.b16 %v1882
      %v1925 = vunpack.c.h.b16 %v1883
      %v1926 = vunpack.c.l.b16 %v1884
      %v1927 = vunpack.c.l.b16 %v1885
      %v1928 = vunpack.c.h.b16 %v1884
      %v1929 = vunpack.c.h.b16 %v1885
      %v1930 = vunpack.c.l.b16 %v1886
      %v1931 = vunpack.c.l.b16 %v1887
      %v1932 = vunpack.c.h.b16 %v1886
      %v1933 = vunpack.c.h.b16 %v1887
      %v1934 = vunpack.c.l.b16 %v1888
      %v1935 = vunpack.c.l.b16 %v1889
      %v1936 = vunpack.c.h.b16 %v1888
      %v1937 = vunpack.c.h.b16 %v1889
      %v1938 = vpack.c.b16 %v1907, %v1906
      %v1939 = vpack.c.b16 %v1909, %v1908
      %v1940 = vpack.c.b16 %v1911, %v1910
      %v1941 = vpack.c.b16 %v1913, %v1912
      %v1942 = vpack.c.b16 %v1915, %v1914
      %v1943 = vpack.c.b16 %v1917, %v1916
      %v1944 = vpack.c.b16 %v1919, %v1918
      %v1945 = vpack.c.b16 %v1921, %v1920
      %v1946 = vpack.c.b16 %v1923, %v1922
      %v1947 = vpack.c.b16 %v1925, %v1924
      %v1948 = vpack.c.b16 %v1927, %v1926
      %v1949 = vpack.c.b16 %v1929, %v1928
      %v1950 = vpack.c.b16 %v1931, %v1930
      %v1951 = vpack.c.b16 %v1933, %v1932
      %v1952 = vpack.c.b16 %v1935, %v1934
      %v1953 = vpack.c.b16 %v1937, %v1936
      %s1970 = sshra.s32 %s1471, 3
      %s1971 = sand.u32 %s1471, 7
      %s1972 = smul.u32 %s1970, 2
      %s1973 = smul.addr %s1972, 4
      %s1974 = scalar_lea.vmem [#allocation3], %s1973
      %vm1975 = vcmask 1043456
      %vm1976 = vcmask 556036
      %vm1977 = vmor %vm1976, %vm1975
      %1978 = vst.msk [vmem:[%s1974] sm:$0xff] %vm1977, %v1938
      %1979 = vst.msk [vmem:[%s1974 + $0x8] sm:$0xff] %vm1977, %v1939
      %1980 = vst.msk [vmem:[%s1974 + $0x10] sm:$0xff] %vm1977, %v1940
      %1981 = vst.msk [vmem:[%s1974 + $0x18] sm:$0xff] %vm1977, %v1941
      %1982 = vst.msk [vmem:[%s1974 + $0x20] sm:$0xff] %vm1977, %v1942
      %1983 = vst.msk [vmem:[%s1974 + $0x28] sm:$0xff] %vm1977, %v1943
      %1984 = vst.msk [vmem:[%s1974 + $0x30] sm:$0xff] %vm1977, %v1944
      %1985 = vst.msk [vmem:[%s1974 + $0x38] sm:$0xff] %vm1977, %v1945
      %1986 = vst.msk [vmem:[%s1974 + $0x40] sm:$0xff] %vm1977, %v1946
      %1987 = vst.msk [vmem:[%s1974 + $0x48] sm:$0xff] %vm1977, %v1947
      %1988 = vst.msk [vmem:[%s1974 + $0x50] sm:$0xff] %vm1977, %v1948
      %1989 = vst.msk [vmem:[%s1974 + $0x58] sm:$0xff] %vm1977, %v1949
      %1990 = vst.msk [vmem:[%s1974 + $0x60] sm:$0xff] %vm1977, %v1950
      %1991 = vst.msk [vmem:[%s1974 + $0x68] sm:$0xff] %vm1977, %v1951
      %1992 = vst.msk [vmem:[%s1974 + $0x70] sm:$0xff] %vm1977, %v1952
      %1993 = vst.msk [vmem:[%s1974 + $0x78] sm:$0xff] %vm1977, %v1953
      %p1994 = scmp.eq.s32.totalorder %s18, 1
      // Predicated region
      $region53: #{tpu_custom_call.1} parent=47 // pred_check
        %p1995 = pneg %p1994
      $region54: #{tpu_custom_call.1} parent=47 // pred_check_branch
        %1997 = sbr.rel (%p1995) target = $region56
      $region55: #{tpu_custom_call.1} parent=47 // pred_region
        %v1998 = vld [vmem:[%s4] sm:$0xff]
        %v1999 = vld [vmem:[%s4 + $0x8] sm:$0xff]
        %v2000 = vld [vmem:[%s4 + $0x10] sm:$0xff]
        %v2001 = vld [vmem:[%s4 + $0x18] sm:$0xff]
        %v2002 = vld [vmem:[%s4 + $0x20] sm:$0xff]
        %v2003 = vld [vmem:[%s4 + $0x28] sm:$0xff]
        %v2004 = vld [vmem:[%s4 + $0x30] sm:$0xff]
        %v2005 = vld [vmem:[%s4 + $0x38] sm:$0xff]
        %v2006 = vld [vmem:[%s4 + $0x40] sm:$0xff]
        %v2007 = vld [vmem:[%s4 + $0x48] sm:$0xff]
        %v2008 = vld [vmem:[%s4 + $0x50] sm:$0xff]
        %v2009 = vld [vmem:[%s4 + $0x58] sm:$0xff]
        %v2010 = vld [vmem:[%s4 + $0x60] sm:$0xff]
        %v2011 = vld [vmem:[%s4 + $0x68] sm:$0xff]
        %v2012 = vld [vmem:[%s4 + $0x70] sm:$0xff]
        %v2013 = vld [vmem:[%s4 + $0x78] sm:$0xff]
        %v2014 = vld [vmem:[%s4 + $0x80] sm:$0xff]
        %v2015 = vld [vmem:[%s4 + $0x88] sm:$0xff]
        %v2016 = vld [vmem:[%s4 + $0x90] sm:$0xff]
        %v2017 = vld [vmem:[%s4 + $0x98] sm:$0xff]
        %v2018 = vld [vmem:[%s4 + $0xa0] sm:$0xff]
        %v2019 = vld [vmem:[%s4 + $0xa8] sm:$0xff]
        %v2020 = vld [vmem:[%s4 + $0xb0] sm:$0xff]
        %v2021 = vld [vmem:[%s4 + $0xb8] sm:$0xff]
        %v2022 = vld [vmem:[%s4 + $0xc0] sm:$0xff]
        %v2023 = vld [vmem:[%s4 + $0xc8] sm:$0xff]
        %v2024 = vld [vmem:[%s4 + $0xd0] sm:$0xff]
        %v2025 = vld [vmem:[%s4 + $0xd8] sm:$0xff]
        %v2026 = vld [vmem:[%s4 + $0xe0] sm:$0xff]
        %v2027 = vld [vmem:[%s4 + $0xe8] sm:$0xff]
        %v2028 = vld [vmem:[%s4 + $0xf0] sm:$0xff]
        %v2029 = vld [vmem:[%s4 + $0xf8] sm:$0xff]
        %v2030 = vld [vmem:[#allocation3] sm:$0xff]
        %v2031 = vld [vmem:[#allocation3 + $0x8] sm:$0xff]
        %v2032 = vld [vmem:[#allocation3 + $0x10] sm:$0xff]
        %v2033 = vld [vmem:[#allocation3 + $0x18] sm:$0xff]
        %v2034 = vld [vmem:[#allocation3 + $0x20] sm:$0xff]
        %v2035 = vld [vmem:[#allocation3 + $0x28] sm:$0xff]
        %v2036 = vld [vmem:[#allocation3 + $0x30] sm:$0xff]
        %v2037 = vld [vmem:[#allocation3 + $0x38] sm:$0xff]
        %v2038 = vld [vmem:[#allocation3 + $0x40] sm:$0xff]
        %v2039 = vld [vmem:[#allocation3 + $0x48] sm:$0xff]
        %v2040 = vld [vmem:[#allocation3 + $0x50] sm:$0xff]
        %v2041 = vld [vmem:[#allocation3 + $0x58] sm:$0xff]
        %v2042 = vld [vmem:[#allocation3 + $0x60] sm:$0xff]
        %v2043 = vld [vmem:[#allocation3 + $0x68] sm:$0xff]
        %v2044 = vld [vmem:[#allocation3 + $0x70] sm:$0xff]
        %v2045 = vld [vmem:[#allocation3 + $0x78] sm:$0xff]
        %v2046 = vld [vmem:[#allocation3 + $0x80] sm:$0xff]
        %v2047 = vld [vmem:[#allocation3 + $0x88] sm:$0xff]
        %v2048 = vld [vmem:[#allocation3 + $0x90] sm:$0xff]
        %v2049 = vld [vmem:[#allocation3 + $0x98] sm:$0xff]
        %v2050 = vld [vmem:[#allocation3 + $0xa0] sm:$0xff]
        %v2051 = vld [vmem:[#allocation3 + $0xa8] sm:$0xff]
        %v2052 = vld [vmem:[#allocation3 + $0xb0] sm:$0xff]
        %v2053 = vld [vmem:[#allocation3 + $0xb8] sm:$0xff]
        %v2054 = vld [vmem:[#allocation3 + $0xc0] sm:$0xff]
        %v2055 = vld [vmem:[#allocation3 + $0xc8] sm:$0xff]
        %v2056 = vld [vmem:[#allocation3 + $0xd0] sm:$0xff]
        %v2057 = vld [vmem:[#allocation3 + $0xd8] sm:$0xff]
        %v2058 = vld [vmem:[#allocation3 + $0xe0] sm:$0xff]
        %v2059 = vld [vmem:[#allocation3 + $0xe8] sm:$0xff]
        %v2060 = vld [vmem:[#allocation3 + $0xf0] sm:$0xff]
        %v2061 = vld [vmem:[#allocation3 + $0xf8] sm:$0xff]
        %v2094 = vunpack.c.l.b16 %v1998
        %v2095 = vunpack.c.h.b16 %v1998
        %v2096 = vunpack.c.l.b16 %v1999
        %v2097 = vunpack.c.h.b16 %v1999
        %v2098 = vunpack.c.l.b16 %v2000
        %v2099 = vunpack.c.h.b16 %v2000
        %v2100 = vunpack.c.l.b16 %v2001
        %v2101 = vunpack.c.h.b16 %v2001
        %v2102 = vunpack.c.l.b16 %v2002
        %v2103 = vunpack.c.h.b16 %v2002
        %v2104 = vunpack.c.l.b16 %v2003
        %v2105 = vunpack.c.h.b16 %v2003
        %v2106 = vunpack.c.l.b16 %v2004
        %v2107 = vunpack.c.h.b16 %v2004
        %v2108 = vunpack.c.l.b16 %v2005
        %v2109 = vunpack.c.h.b16 %v2005
        %v2110 = vunpack.c.l.b16 %v2006
        %v2111 = vunpack.c.h.b16 %v2006
        %v2112 = vunpack.c.l.b16 %v2007
        %v2113 = vunpack.c.h.b16 %v2007
        %v2114 = vunpack.c.l.b16 %v2008
        %v2115 = vunpack.c.h.b16 %v2008
        %v2116 = vunpack.c.l.b16 %v2009
        %v2117 = vunpack.c.h.b16 %v2009
        %v2118 = vunpack.c.l.b16 %v2010
        %v2119 = vunpack.c.h.b16 %v2010
        %v2120 = vunpack.c.l.b16 %v2011
        %v2121 = vunpack.c.h.b16 %v2011
        %v2122 = vunpack.c.l.b16 %v2012
        %v2123 = vunpack.c.h.b16 %v2012
        %v2124 = vunpack.c.l.b16 %v2013
        %v2125 = vunpack.c.h.b16 %v2013
        %v2126 = vunpack.c.l.b16 %v2014
        %v2127 = vunpack.c.h.b16 %v2014
        %v2128 = vunpack.c.l.b16 %v2015
        %v2129 = vunpack.c.h.b16 %v2015
        %v2130 = vunpack.c.l.b16 %v2016
        %v2131 = vunpack.c.h.b16 %v2016
        %v2132 = vunpack.c.l.b16 %v2017
        %v2133 = vunpack.c.h.b16 %v2017
        %v2134 = vunpack.c.l.b16 %v2018
        %v2135 = vunpack.c.h.b16 %v2018
        %v2136 = vunpack.c.l.b16 %v2019
        %v2137 = vunpack.c.h.b16 %v2019
        %v2138 = vunpack.c.l.b16 %v2020
        %v2139 = vunpack.c.h.b16 %v2020
        %v2140 = vunpack.c.l.b16 %v2021
        %v2141 = vunpack.c.h.b16 %v2021
        %v2142 = vunpack.c.l.b16 %v2022
        %v2143 = vunpack.c.h.b16 %v2022
        %v2144 = vunpack.c.l.b16 %v2023
        %v2145 = vunpack.c.h.b16 %v2023
        %v2146 = vunpack.c.l.b16 %v2024
        %v2147 = vunpack.c.h.b16 %v2024
        %v2148 = vunpack.c.l.b16 %v2025
        %v2149 = vunpack.c.h.b16 %v2025
        %v2150 = vunpack.c.l.b16 %v2026
        %v2151 = vunpack.c.h.b16 %v2026
        %v2152 = vunpack.c.l.b16 %v2027
        %v2153 = vunpack.c.h.b16 %v2027
        %v2154 = vunpack.c.l.b16 %v2028
        %v2155 = vunpack.c.h.b16 %v2028
        %v2156 = vunpack.c.l.b16 %v2029
        %v2157 = vunpack.c.h.b16 %v2029
        %v2158 = vpack.c.b16 %v2096, %v2094
        %v2159 = vpack.c.b16 %v2097, %v2095
        %v2160 = vpack.c.b16 %v2100, %v2098
        %v2161 = vpack.c.b16 %v2101, %v2099
        %v2162 = vpack.c.b16 %v2104, %v2102
        %v2163 = vpack.c.b16 %v2105, %v2103
        %v2164 = vpack.c.b16 %v2108, %v2106
        %v2165 = vpack.c.b16 %v2109, %v2107
        %v2166 = vpack.c.b16 %v2112, %v2110
        %v2167 = vpack.c.b16 %v2113, %v2111
        %v2168 = vpack.c.b16 %v2116, %v2114
        %v2169 = vpack.c.b16 %v2117, %v2115
        %v2170 = vpack.c.b16 %v2120, %v2118
        %v2171 = vpack.c.b16 %v2121, %v2119
        %v2172 = vpack.c.b16 %v2124, %v2122
        %v2173 = vpack.c.b16 %v2125, %v2123
        %v2174 = vpack.c.b16 %v2128, %v2126
        %v2175 = vpack.c.b16 %v2129, %v2127
        %v2176 = vpack.c.b16 %v2132, %v2130
        %v2177 = vpack.c.b16 %v2133, %v2131
        %v2178 = vpack.c.b16 %v2136, %v2134
        %v2179 = vpack.c.b16 %v2137, %v2135
        %v2180 = vpack.c.b16 %v2140, %v2138
        %v2181 = vpack.c.b16 %v2141, %v2139
        %v2182 = vpack.c.b16 %v2144, %v2142
        %v2183 = vpack.c.b16 %v2145, %v2143
        %v2184 = vpack.c.b16 %v2148, %v2146
        %v2185 = vpack.c.b16 %v2149, %v2147
        %v2186 = vpack.c.b16 %v2152, %v2150
        %v2187 = vpack.c.b16 %v2153, %v2151
        %v2188 = vpack.c.b16 %v2156, %v2154
        %v2189 = vpack.c.b16 %v2157, %v2155
        %v2254 = vunpack.c.l.b16 %v2030
        %v2255 = vunpack.c.h.b16 %v2030
        %v2256 = vunpack.c.l.b16 %v2031
        %v2257 = vunpack.c.h.b16 %v2031
        %v2258 = vunpack.c.l.b16 %v2032
        %v2259 = vunpack.c.h.b16 %v2032
        %v2260 = vunpack.c.l.b16 %v2033
        %v2261 = vunpack.c.h.b16 %v2033
        %v2262 = vunpack.c.l.b16 %v2034
        %v2263 = vunpack.c.h.b16 %v2034
        %v2264 = vunpack.c.l.b16 %v2035
        %v2265 = vunpack.c.h.b16 %v2035
        %v2266 = vunpack.c.l.b16 %v2036
        %v2267 = vunpack.c.h.b16 %v2036
        %v2268 = vunpack.c.l.b16 %v2037
        %v2269 = vunpack.c.h.b16 %v2037
        %v2270 = vunpack.c.l.b16 %v2038
        %v2271 = vunpack.c.h.b16 %v2038
        %v2272 = vunpack.c.l.b16 %v2039
        %v2273 = vunpack.c.h.b16 %v2039
        %v2274 = vunpack.c.l.b16 %v2040
        %v2275 = vunpack.c.h.b16 %v2040
        %v2276 = vunpack.c.l.b16 %v2041
        %v2277 = vunpack.c.h.b16 %v2041
        %v2278 = vunpack.c.l.b16 %v2042
        %v2279 = vunpack.c.h.b16 %v2042
        %v2280 = vunpack.c.l.b16 %v2043
        %v2281 = vunpack.c.h.b16 %v2043
        %v2282 = vunpack.c.l.b16 %v2044
        %v2283 = vunpack.c.h.b16 %v2044
        %v2284 = vunpack.c.l.b16 %v2045
        %v2285 = vunpack.c.h.b16 %v2045
        %v2286 = vunpack.c.l.b16 %v2046
        %v2287 = vunpack.c.h.b16 %v2046
        %v2288 = vunpack.c.l.b16 %v2047
        %v2289 = vunpack.c.h.b16 %v2047
        %v2290 = vunpack.c.l.b16 %v2048
        %v2291 = vunpack.c.h.b16 %v2048
        %v2292 = vunpack.c.l.b16 %v2049
        %v2293 = vunpack.c.h.b16 %v2049
        %v2294 = vunpack.c.l.b16 %v2050
        %v2295 = vunpack.c.h.b16 %v2050
        %v2296 = vunpack.c.l.b16 %v2051
        %v2297 = vunpack.c.h.b16 %v2051
        %v2298 = vunpack.c.l.b16 %v2052
        %v2299 = vunpack.c.h.b16 %v2052
        %v2300 = vunpack.c.l.b16 %v2053
        %v2301 = vunpack.c.h.b16 %v2053
        %v2302 = vunpack.c.l.b16 %v2054
        %v2303 = vunpack.c.h.b16 %v2054
        %v2304 = vunpack.c.l.b16 %v2055
        %v2305 = vunpack.c.h.b16 %v2055
        %v2306 = vunpack.c.l.b16 %v2056
        %v2307 = vunpack.c.h.b16 %v2056
        %v2308 = vunpack.c.l.b16 %v2057
        %v2309 = vunpack.c.h.b16 %v2057
        %v2310 = vunpack.c.l.b16 %v2058
        %v2311 = vunpack.c.h.b16 %v2058
        %v2312 = vunpack.c.l.b16 %v2059
        %v2313 = vunpack.c.h.b16 %v2059
        %v2314 = vunpack.c.l.b16 %v2060
        %v2315 = vunpack.c.h.b16 %v2060
        %v2316 = vunpack.c.l.b16 %v2061
        %v2317 = vunpack.c.h.b16 %v2061
        %v2318 = vpack.c.b16 %v2256, %v2254
        %v2319 = vpack.c.b16 %v2257, %v2255
        %v2320 = vpack.c.b16 %v2260, %v2258
        %v2321 = vpack.c.b16 %v2261, %v2259
        %v2322 = vpack.c.b16 %v2264, %v2262
        %v2323 = vpack.c.b16 %v2265, %v2263
        %v2324 = vpack.c.b16 %v2268, %v2266
        %v2325 = vpack.c.b16 %v2269, %v2267
        %v2326 = vpack.c.b16 %v2272, %v2270
        %v2327 = vpack.c.b16 %v2273, %v2271
        %v2328 = vpack.c.b16 %v2276, %v2274
        %v2329 = vpack.c.b16 %v2277, %v2275
        %v2330 = vpack.c.b16 %v2280, %v2278
        %v2331 = vpack.c.b16 %v2281, %v2279
        %v2332 = vpack.c.b16 %v2284, %v2282
        %v2333 = vpack.c.b16 %v2285, %v2283
        %v2334 = vpack.c.b16 %v2288, %v2286
        %v2335 = vpack.c.b16 %v2289, %v2287
        %v2336 = vpack.c.b16 %v2292, %v2290
        %v2337 = vpack.c.b16 %v2293, %v2291
        %v2338 = vpack.c.b16 %v2296, %v2294
        %v2339 = vpack.c.b16 %v2297, %v2295
        %v2340 = vpack.c.b16 %v2300, %v2298
        %v2341 = vpack.c.b16 %v2301, %v2299
        %v2342 = vpack.c.b16 %v2304, %v2302
        %v2343 = vpack.c.b16 %v2305, %v2303
        %v2344 = vpack.c.b16 %v2308, %v2306
        %v2345 = vpack.c.b16 %v2309, %v2307
        %v2346 = vpack.c.b16 %v2312, %v2310
        %v2347 = vpack.c.b16 %v2313, %v2311
        %v2348 = vpack.c.b16 %v2316, %v2314
        %v2349 = vpack.c.b16 %v2317, %v2315
        %2382 = vmatprep.subr.bf16.mxu0 %v2333
        %2383 = vmatpush1.bf16.msra.mxu0 %v2332
        %2384 = vmatprep.subr.bf16.mxu0 %v2331
        %2385 = vmatpush1.bf16.msra.mxu0 %v2330
        %2386 = vmatprep.subr.bf16.mxu0 %v2329
        %2387 = vmatpush1.bf16.msra.mxu0 %v2328
        %2388 = vmatprep.subr.bf16.mxu0 %v2327
        %2389 = vmatpush1.bf16.msra.mxu0 %v2326
        %2390 = vmatprep.subr.bf16.mxu0 %v2325
        %2391 = vmatpush1.bf16.msra.mxu0 %v2324
        %2392 = vmatprep.subr.bf16.mxu0 %v2323
        %2393 = vmatpush1.bf16.msra.mxu0 %v2322
        %2394 = vmatprep.subr.bf16.mxu0 %v2321
        %2395 = vmatpush1.bf16.msra.mxu0 %v2320
        %2396 = vmatprep.subr.bf16.mxu0 %v2319
        %2397 = vmatpush1.bf16.msra.mxu0 %v2318
        %2398 = vmatprep.subr.bf16.mxu0 %v2349
        %2399 = vmatpush2.bf16.msra.mxu0 %v2348
        %2400 = vmatprep.subr.bf16.mxu0 %v2347
        %2401 = vmatpush2.bf16.msra.mxu0 %v2346
        %2402 = vmatprep.subr.bf16.mxu0 %v2345
        %2403 = vmatpush2.bf16.msra.mxu0 %v2344
        %2404 = vmatprep.subr.bf16.mxu0 %v2343
        %2405 = vmatpush2.bf16.msra.mxu0 %v2342
        %2406 = vmatprep.subr.bf16.mxu0 %v2341
        %2407 = vmatpush2.bf16.msra.mxu0 %v2340
        %2408 = vmatprep.subr.bf16.mxu0 %v2339
        %2409 = vmatpush2.bf16.msra.mxu0 %v2338
        %2410 = vmatprep.subr.bf16.mxu0 %v2337
        %2411 = vmatpush2.bf16.msra.mxu0 %v2336
        %2412 = vmatprep.subr.bf16.mxu0 %v2335
        %2413 = vmatpush2.bf16.msra.mxu0 %v2334
        %2414 = vmatprep.mubr.bf16.mxu0 %v2159
        %2415 = vmatmul.mubr.bf16.gmra.mxu0 %v2158
        %v2416 = vpop.f32.mrf.mxu0
        %v2417 = vadd.f32 0.0, %v2416
        %v2418 = vpop.f32.mrf.mxu0
        %v2419 = vadd.f32 0.0, %v2418
        %v2420 = vpop.f32.mrf.mxu0
        %v2421 = vadd.f32 0.0, %v2420
        %v2422 = vpop.f32.mrf.mxu0
        %v2423 = vadd.f32 0.0, %v2422
        %2424 = vmatprep.mubr.bf16.mxu0 %v2161
        %2425 = vmatmul.mubr.bf16.gmra.mxu0 %v2160
        %v2426 = vpop.f32.mrf.mxu0
        %v2427 = vadd.f32 0.0, %v2426
        %v2428 = vpop.f32.mrf.mxu0
        %v2429 = vadd.f32 0.0, %v2428
        %v2430 = vpop.f32.mrf.mxu0
        %v2431 = vadd.f32 0.0, %v2430
        %v2432 = vpop.f32.mrf.mxu0
        %v2433 = vadd.f32 0.0, %v2432
        %2434 = vmatprep.mubr.bf16.mxu0 %v2163
        %2435 = vmatmul.mubr.bf16.gmra.mxu0 %v2162
        %v2436 = vpop.f32.mrf.mxu0
        %v2437 = vadd.f32 0.0, %v2436
        %v2438 = vpop.f32.mrf.mxu0
        %v2439 = vadd.f32 0.0, %v2438
        %v2440 = vpop.f32.mrf.mxu0
        %v2441 = vadd.f32 0.0, %v2440
        %v2442 = vpop.f32.mrf.mxu0
        %v2443 = vadd.f32 0.0, %v2442
        %2444 = vmatprep.mubr.bf16.mxu0 %v2165
        %2445 = vmatmul.mubr.bf16.gmra.mxu0 %v2164
        %v2446 = vpop.f32.mrf.mxu0
        %v2447 = vadd.f32 0.0, %v2446
        %v2448 = vpop.f32.mrf.mxu0
        %v2449 = vadd.f32 0.0, %v2448
        %v2450 = vpop.f32.mrf.mxu0
        %v2451 = vadd.f32 0.0, %v2450
        %v2452 = vpop.f32.mrf.mxu0
        %v2453 = vadd.f32 0.0, %v2452
        %2454 = vmatprep.mubr.bf16.mxu0 %v2167
        %2455 = vmatmul.mubr.bf16.gmra.mxu0 %v2166
        %v2456 = vpop.f32.mrf.mxu0
        %v2457 = vadd.f32 0.0, %v2456
        %v2458 = vpop.f32.mrf.mxu0
        %v2459 = vadd.f32 0.0, %v2458
        %v2460 = vpop.f32.mrf.mxu0
        %v2461 = vadd.f32 0.0, %v2460
        %v2462 = vpop.f32.mrf.mxu0
        %v2463 = vadd.f32 0.0, %v2462
        %2464 = vmatprep.mubr.bf16.mxu0 %v2169
        %2465 = vmatmul.mubr.bf16.gmra.mxu0 %v2168
        %v2466 = vpop.f32.mrf.mxu0
        %v2467 = vadd.f32 0.0, %v2466
        %v2468 = vpop.f32.mrf.mxu0
        %v2469 = vadd.f32 0.0, %v2468
        %v2470 = vpop.f32.mrf.mxu0
        %v2471 = vadd.f32 0.0, %v2470
        %v2472 = vpop.f32.mrf.mxu0
        %v2473 = vadd.f32 0.0, %v2472
        %2474 = vmatprep.mubr.bf16.mxu0 %v2171
        %2475 = vmatmul.mubr.bf16.gmra.mxu0 %v2170
        %v2476 = vpop.f32.mrf.mxu0
        %v2477 = vadd.f32 0.0, %v2476
        %v2478 = vpop.f32.mrf.mxu0
        %v2479 = vadd.f32 0.0, %v2478
        %v2480 = vpop.f32.mrf.mxu0
        %v2481 = vadd.f32 0.0, %v2480
        %v2482 = vpop.f32.mrf.mxu0
        %v2483 = vadd.f32 0.0, %v2482
        %2484 = vmatprep.mubr.bf16.mxu0 %v2173
        %2485 = vmatmul.mubr.bf16.gmra.mxu0 %v2172
        %v2486 = vpop.f32.mrf.mxu0
        %v2487 = vadd.f32 0.0, %v2486
        %v2488 = vpop.f32.mrf.mxu0
        %v2489 = vadd.f32 0.0, %v2488
        %v2490 = vpop.f32.mrf.mxu0
        %v2491 = vadd.f32 0.0, %v2490
        %v2492 = vpop.f32.mrf.mxu0
        %v2493 = vadd.f32 0.0, %v2492
        %2494 = vmatprep.mubr.bf16.mxu0 %v2175
        %2495 = vmatmul.mubr.bf16.gmra.mxu0 %v2174
        %v2496 = vpop.f32.mrf.mxu0
        %v2497 = vadd.f32 0.0, %v2496
        %v2498 = vpop.f32.mrf.mxu0
        %v2499 = vadd.f32 0.0, %v2498
        %v2500 = vpop.f32.mrf.mxu0
        %v2501 = vadd.f32 0.0, %v2500
        %v2502 = vpop.f32.mrf.mxu0
        %v2503 = vadd.f32 0.0, %v2502
        %2504 = vmatprep.mubr.bf16.mxu0 %v2177
        %2505 = vmatmul.mubr.bf16.gmra.mxu0 %v2176
        %v2506 = vpop.f32.mrf.mxu0
        %v2507 = vadd.f32 0.0, %v2506
        %v2508 = vpop.f32.mrf.mxu0
        %v2509 = vadd.f32 0.0, %v2508
        %v2510 = vpop.f32.mrf.mxu0
        %v2511 = vadd.f32 0.0, %v2510
        %v2512 = vpop.f32.mrf.mxu0
        %v2513 = vadd.f32 0.0, %v2512
        %2514 = vmatprep.mubr.bf16.mxu0 %v2179
        %2515 = vmatmul.mubr.bf16.gmra.mxu0 %v2178
        %v2516 = vpop.f32.mrf.mxu0
        %v2517 = vadd.f32 0.0, %v2516
        %v2518 = vpop.f32.mrf.mxu0
        %v2519 = vadd.f32 0.0, %v2518
        %v2520 = vpop.f32.mrf.mxu0
        %v2521 = vadd.f32 0.0, %v2520
        %v2522 = vpop.f32.mrf.mxu0
        %v2523 = vadd.f32 0.0, %v2522
        %2524 = vmatprep.mubr.bf16.mxu0 %v2181
        %2525 = vmatmul.mubr.bf16.gmra.mxu0 %v2180
        %v2526 = vpop.f32.mrf.mxu0
        %v2527 = vadd.f32 0.0, %v2526
        %v2528 = vpop.f32.mrf.mxu0
        %v2529 = vadd.f32 0.0, %v2528
        %v2530 = vpop.f32.mrf.mxu0
        %v2531 = vadd.f32 0.0, %v2530
        %v2532 = vpop.f32.mrf.mxu0
        %v2533 = vadd.f32 0.0, %v2532
        %2534 = vmatprep.mubr.bf16.mxu0 %v2183
        %2535 = vmatmul.mubr.bf16.gmra.mxu0 %v2182
        %v2536 = vpop.f32.mrf.mxu0
        %v2537 = vadd.f32 0.0, %v2536
        %v2538 = vpop.f32.mrf.mxu0
        %v2539 = vadd.f32 0.0, %v2538
        %v2540 = vpop.f32.mrf.mxu0
        %v2541 = vadd.f32 0.0, %v2540
        %v2542 = vpop.f32.mrf.mxu0
        %v2543 = vadd.f32 0.0, %v2542
        %2544 = vmatprep.mubr.bf16.mxu0 %v2185
        %2545 = vmatmul.mubr.bf16.gmra.mxu0 %v2184
        %v2546 = vpop.f32.mrf.mxu0
        %v2547 = vadd.f32 0.0, %v2546
        %v2548 = vpop.f32.mrf.mxu0
        %v2549 = vadd.f32 0.0, %v2548
        %v2550 = vpop.f32.mrf.mxu0
        %v2551 = vadd.f32 0.0, %v2550
        %v2552 = vpop.f32.mrf.mxu0
        %v2553 = vadd.f32 0.0, %v2552
        %2554 = vmatprep.mubr.bf16.mxu0 %v2187
        %2555 = vmatmul.mubr.bf16.gmra.mxu0 %v2186
        %v2556 = vpop.f32.mrf.mxu0
        %v2557 = vadd.f32 0.0, %v2556
        %v2558 = vpop.f32.mrf.mxu0
        %v2559 = vadd.f32 0.0, %v2558
        %v2560 = vpop.f32.mrf.mxu0
        %v2561 = vadd.f32 0.0, %v2560
        %v2562 = vpop.f32.mrf.mxu0
        %v2563 = vadd.f32 0.0, %v2562
        %2564 = vmatprep.mubr.bf16.mxu0 %v2189
        %2565 = vmatmul.mubr.bf16.gmra.mxu0 %v2188
        %v2566 = vpop.f32.mrf.mxu0
        %v2567 = vadd.f32 0.0, %v2566
        %v2568 = vpop.f32.mrf.mxu0
        %v2569 = vadd.f32 0.0, %v2568
        %v2570 = vpop.f32.mrf.mxu0
        %v2571 = vadd.f32 0.0, %v2570
        %v2572 = vpop.f32.mrf.mxu0
        %v2573 = vadd.f32 0.0, %v2572
        %2574 = vdwg.mxu0
        %2575 = vst [vmem:[%s7] sm:$0xff] %v2417
        %2576 = vst.msk [vmem:[%s7 + $0x8] sm:$0xff] %vm1246, %v2419
        %2577 = vst [vmem:[%s7 + $0x10] sm:$0xff] %v2421
        %2578 = vst.msk [vmem:[%s7 + $0x18] sm:$0xff] %vm1246, %v2423
        %2579 = vst [vmem:[%s7 + $0x20] sm:$0xff] %v2427
        %2580 = vst.msk [vmem:[%s7 + $0x28] sm:$0xff] %vm1246, %v2429
        %2581 = vst [vmem:[%s7 + $0x30] sm:$0xff] %v2431
        %2582 = vst.msk [vmem:[%s7 + $0x38] sm:$0xff] %vm1246, %v2433
        %2583 = vst [vmem:[%s7 + $0x40] sm:$0xff] %v2437
        %2584 = vst.msk [vmem:[%s7 + $0x48] sm:$0xff] %vm1246, %v2439
        %2585 = vst [vmem:[%s7 + $0x50] sm:$0xff] %v2441
        %2586 = vst.msk [vmem:[%s7 + $0x58] sm:$0xff] %vm1246, %v2443
        %2587 = vst [vmem:[%s7 + $0x60] sm:$0xff] %v2447
        %2588 = vst.msk [vmem:[%s7 + $0x68] sm:$0xff] %vm1246, %v2449
        %2589 = vst [vmem:[%s7 + $0x70] sm:$0xff] %v2451
        %2590 = vst.msk [vmem:[%s7 + $0x78] sm:$0xff] %vm1246, %v2453
        %2591 = vst [vmem:[%s7 + $0x80] sm:$0xff] %v2457
        %2592 = vst.msk [vmem:[%s7 + $0x88] sm:$0xff] %vm1246, %v2459
        %2593 = vst [vmem:[%s7 + $0x90] sm:$0xff] %v2461
        %2594 = vst.msk [vmem:[%s7 + $0x98] sm:$0xff] %vm1246, %v2463
        %2595 = vst [vmem:[%s7 + $0xa0] sm:$0xff] %v2467
        %2596 = vst.msk [vmem:[%s7 + $0xa8] sm:$0xff] %vm1246, %v2469
        %2597 = vst [vmem:[%s7 + $0xb0] sm:$0xff] %v2471
        %2598 = vst.msk [vmem:[%s7 + $0xb8] sm:$0xff] %vm1246, %v2473
        %2599 = vst [vmem:[%s7 + $0xc0] sm:$0xff] %v2477
        %2600 = vst.msk [vmem:[%s7 + $0xc8] sm:$0xff] %vm1246, %v2479
        %2601 = vst [vmem:[%s7 + $0xd0] sm:$0xff] %v2481
        %2602 = vst.msk [vmem:[%s7 + $0xd8] sm:$0xff] %vm1246, %v2483
        %2603 = vst [vmem:[%s7 + $0xe0] sm:$0xff] %v2487
        %2604 = vst.msk [vmem:[%s7 + $0xe8] sm:$0xff] %vm1246, %v2489
        %2605 = vst [vmem:[%s7 + $0xf0] sm:$0xff] %v2491
        %2606 = vst.msk [vmem:[%s7 + $0xf8] sm:$0xff] %vm1246, %v2493
        %2607 = vst [vmem:[%s7 + $0x100] sm:$0xff] %v2497
        %2608 = vst.msk [vmem:[%s7 + $0x108] sm:$0xff] %vm1246, %v2499
        %2609 = vst [vmem:[%s7 + $0x110] sm:$0xff] %v2501
        %2610 = vst.msk [vmem:[%s7 + $0x118] sm:$0xff] %vm1246, %v2503
        %2611 = vst [vmem:[%s7 + $0x120] sm:$0xff] %v2507
        %2612 = vst.msk [vmem:[%s7 + $0x128] sm:$0xff] %vm1246, %v2509
        %2613 = vst [vmem:[%s7 + $0x130] sm:$0xff] %v2511
        %2614 = vst.msk [vmem:[%s7 + $0x138] sm:$0xff] %vm1246, %v2513
        %2615 = vst [vmem:[%s7 + $0x140] sm:$0xff] %v2517
        %2616 = vst.msk [vmem:[%s7 + $0x148] sm:$0xff] %vm1246, %v2519
        %2617 = vst [vmem:[%s7 + $0x150] sm:$0xff] %v2521
        %2618 = vst.msk [vmem:[%s7 + $0x158] sm:$0xff] %vm1246, %v2523
        %2619 = vst [vmem:[%s7 + $0x160] sm:$0xff] %v2527
        %2620 = vst.msk [vmem:[%s7 + $0x168] sm:$0xff] %vm1246, %v2529
        %2621 = vst [vmem:[%s7 + $0x170] sm:$0xff] %v2531
        %2622 = vst.msk [vmem:[%s7 + $0x178] sm:$0xff] %vm1246, %v2533
        %2623 = vst [vmem:[%s7 + $0x180] sm:$0xff] %v2537
        %2624 = vst.msk [vmem:[%s7 + $0x188] sm:$0xff] %vm1246, %v2539
        %2625 = vst [vmem:[%s7 + $0x190] sm:$0xff] %v2541
        %2626 = vst.msk [vmem:[%s7 + $0x198] sm:$0xff] %vm1246, %v2543
        %2627 = vst [vmem:[%s7 + $0x1a0] sm:$0xff] %v2547
        %2628 = vst.msk [vmem:[%s7 + $0x1a8] sm:$0xff] %vm1246, %v2549
        %2629 = vst [vmem:[%s7 + $0x1b0] sm:$0xff] %v2551
        %2630 = vst.msk [vmem:[%s7 + $0x1b8] sm:$0xff] %vm1246, %v2553
        %2631 = vst [vmem:[%s7 + $0x1c0] sm:$0xff] %v2557
        %2632 = vst.msk [vmem:[%s7 + $0x1c8] sm:$0xff] %vm1246, %v2559
        %2633 = vst [vmem:[%s7 + $0x1d0] sm:$0xff] %v2561
        %2634 = vst.msk [vmem:[%s7 + $0x1d8] sm:$0xff] %vm1246, %v2563
        %2635 = vst [vmem:[%s7 + $0x1e0] sm:$0xff] %v2567
        %2636 = vst.msk [vmem:[%s7 + $0x1e8] sm:$0xff] %vm1246, %v2569
        %2637 = vst [vmem:[%s7 + $0x1f0] sm:$0xff] %v2571
        %2638 = vst.msk [vmem:[%s7 + $0x1f8] sm:$0xff] %vm1246, %v2573
      $region56: #{tpu_custom_call.1} parent=47 // pred_fallthru
        _
      // Predicated region
      $region57: #{tpu_custom_call.1} parent=47 // pred_check
        %p2639 = pneg %p188
      $region58: #{tpu_custom_call.1} parent=47 // pred_check_branch
        %2641 = sbr.rel (%p2639) target = $region60
      $region59: #{tpu_custom_call.1} parent=47 // pred_region
        _
      $region60: #{tpu_custom_call.1} parent=47 // pred_fallthru
        _
      // Predicated region
      $region61: #{tpu_custom_call.1} parent=47 // pred_check
        %p2642 = pneg %p188
      $region62: #{tpu_custom_call.1} parent=47 // pred_check_branch
        %2644 = sbr.rel (%p2642) target = $region64
      $region63: #{tpu_custom_call.1} parent=47 // pred_region
        _
      $region64: #{tpu_custom_call.1} parent=47 // pred_fallthru
        _
    $region48: #{tpu_custom_call.1} parent=5 // pred_fallthru
      _
    %p2645 = scmp.le.s32.totalorder 2, %s13
    // Predicated region
    $region65: #{tpu_custom_call.1} parent=5 // pred_check
      %p2646 = pneg %p2645
    $region66: #{tpu_custom_call.1} parent=5 // pred_check_branch
      %2648 = sbr.rel (%p2646) target = $region68
    $region67: #{tpu_custom_call.1} parent=5 // pred_region
      %s2649 = ssub.s32 %s13, 2
    $region68: #{tpu_custom_call.1} parent=5 // pred_fallthru
      _
  $region6: #{tpu_custom_call.1} parent=0 // loop_footer
    %s17 = sadd.s32 1, %s13
  $region7: #{tpu_custom_call.1} parent=0 // loop_footer_branch
    %12 = sbr.rel target = $region3
  $region8: #{tpu_custom_call.1} parent=0 // loop_exit
    _

</llo_original>
